<compile_context>
chip_gen: v7x
topology: tpu7x:2x2x1
jax: 0.10.0
libtpu: 0.0.40
codegen_flags: <defaults>
</compile_context>

<pallas_src>
import functools

import jax
import jax.numpy as jnp
import numpy as np
from jax.experimental import pallas as pl
from jax.experimental.pallas import tpu as pltpu


def _layernorm(v, g, b, eps=1e-6):
    mu = jnp.mean(v, axis=-1, keepdims=True)
    var = jnp.mean((v - mu) ** 2, axis=-1, keepdims=True)
    return (v - mu) * jax.lax.rsqrt(var + eps) * g + b


def encoder_block_kernel(x_ref, vec_ref, wqkv_ref, wo_h_ref, w1_ref, w2_ref,
                         out_ref,
                         *, B, T, C, n_head, head_size, hidden):
    x = x_ref[...].astype(jnp.float32)                      # (B*T, C)

    # Packed bias / affine slab: rows [ln1_g, ln1_b, bo, ln2_g, ln2_b, b2, b1, pad].
    vecs = vec_ref[...]                                     # (8, hidden)
    ln1_g = vecs[0:1, :C]
    ln1_b = vecs[1:2, :C]
    bo = vecs[2:3, :C]
    ln2_g = vecs[3:4, :C]
    ln2_b = vecs[4:5, :C]
    b2 = vecs[5:6, :C]
    b1 = vecs[6:7, :]                                       # (1, hidden)

    # --- LayerNorm 1 + multi-head self-attention (communication) ---
    xn = _layernorm(x, ln1_g, ln1_b)
    # Fused QKV projection: one (B*T, C) x (C, 3C) MXU push.
    # The 1/sqrt(head_size) scale is already folded into the Wq columns.
    qkv = jnp.dot(xn, wqkv_ref[...], preferred_element_type=jnp.float32)  # (B*T, 3C)

    def stack_heads(off):
        # Static lane slices + axis-0 concat + leading-dim reshape only
        # (no lane-splitting reshapes): result (n_head*B, T, head_size),
        # batch index n = h*B + b.
        parts = [qkv[:, off + h * head_size: off + (h + 1) * head_size]
                 for h in range(n_head)]
        return jnp.concatenate(parts, axis=0).reshape(n_head * B, T, head_size)

    q = stack_heads(0)
    k = stack_heads(C)
    v = stack_heads(2 * C)

    # All (batch, head) attention matrices in two batched dot_generals.
    s = jnp.einsum('nqd,nkd->nqk', q, k, preferred_element_type=jnp.float32)
    s = s - jnp.max(s, axis=-1, keepdims=True)               # masked=False: no causal mask
    p = jnp.exp(s)
    # EUP reciprocal instead of a VALU divide (kernel is nowhere near VALU-bound).
    p = p * pl.reciprocal(jnp.sum(p, axis=-1, keepdims=True), approx=True)
    o = jnp.einsum('nqk,nkd->nqd', p, v, preferred_element_type=jnp.float32)  # (H*B, T, hs)

    # Fold the head merge into the output projection: contract d per head against the
    # pre-reshaped Wo (n_head, head_size, C), then sum the n_head partials.
    o = o.reshape(n_head, B * T, head_size)                  # (H, B*T, hs)
    partial = jnp.einsum('hnd,hdc->hnc', o, wo_h_ref[...],
                         preferred_element_type=jnp.float32)  # (H, B*T, C)
    sa = partial[0]
    for h in range(1, n_head):
        sa = sa + partial[h]
    x = x + sa + bo                                          # residual 1

    # --- LayerNorm 2 + feed-forward (computation) ---
    xn2 = _layernorm(x, ln2_g, ln2_b)
    h1 = jnp.maximum(
        jnp.dot(xn2, w1_ref[...], preferred_element_type=jnp.float32) + b1, 0.0)
    ff = jnp.dot(h1, w2_ref[...], preferred_element_type=jnp.float32) + b2
    x = x + ff                                               # residual 2

    out_ref[...] = x.astype(out_ref.dtype)


def prepare_params(params, *, n_head):
    """One-time host-side parameter transform:
       * fuse Wq|Wk|Wv into a single (C, 3C) weight, fold 1/sqrt(head_size) into Wq
       * reshape Wo to (n_head, head_size, C) for the folded head-merge einsum
       * pack the seven small bias/affine vectors into one (8, hidden) slab."""
    (ln1_g, ln1_b, wq, wk, wv, wo, bo, ln2_g, ln2_b, w1, b1, w2, b2) = params
    C = wq.shape[0]
    hidden = w1.shape[1]
    head_size = C // n_head
    scale = 1.0 / (head_size ** 0.5)

    wqkv = jnp.concatenate([wq * scale, wk, wv], axis=1)     # (C, 3C)
    wo_heads = wo.reshape(n_head, head_size, C)              # (H, hs, C)

    vec = jnp.zeros((8, hidden), dtype=jnp.float32)
    vec = vec.at[0, :C].set(ln1_g[0])
    vec = vec.at[1, :C].set(ln1_b[0])
    vec = vec.at[2, :C].set(bo[0])
    vec = vec.at[3, :C].set(ln2_g[0])
    vec = vec.at[4, :C].set(ln2_b[0])
    vec = vec.at[5, :C].set(b2[0])
    vec = vec.at[6, :].set(b1[0])
    return (vec, wqkv, wo_heads, w1, w2)


def encoder_block(x, prepared_params, *, n_head):
    B, T, C = x.shape
    head_size = C // n_head
    vec, wqkv, wo_heads, w1, w2 = prepared_params
    hidden = w1.shape[1]
    x2 = x.reshape(B * T, C)             # contiguous reshape: free metadata op

    full = lambda shape: pl.BlockSpec(shape, lambda i: tuple(0 for _ in shape))
    in_specs = [
        full((B * T, C)),                                    # x (whole problem, one step)
        full((8, hidden)),                                   # packed bias/affine slab
        full((C, 3 * C)),                                    # fused Wqkv (scale folded in)
        full((n_head, head_size, C)),                        # Wo reshaped per head
        full((C, hidden)),                                   # FF W1
        full((hidden, C)),                                   # FF W2
    ]

    kernel = functools.partial(encoder_block_kernel, B=B, T=T, C=C,
                               n_head=n_head, head_size=head_size, hidden=hidden)
    out2 = pl.pallas_call(
        kernel,
        out_shape=jax.ShapeDtypeStruct((B * T, C), x.dtype),
        grid=(1,),                                           # fully collapsed grid
        in_specs=in_specs,
        out_specs=full((B * T, C)),
        compiler_params=pltpu.CompilerParams(dimension_semantics=("arbitrary",)),
    )(x2, vec, wqkv, wo_heads, w1, w2)
    return out2.reshape(B, T, C)


def reference_block(x, params, *, n_head):
    (ln1_g, ln1_b, wq, wk, wv, wo, bo, ln2_g, ln2_b, w1, b1, w2, b2) = params
    B, T, C = x.shape
    hs = C // n_head

    def ln(v, g, b):
        mu = v.mean(-1, keepdims=True)
        var = ((v - mu) ** 2).mean(-1, keepdims=True)
        return (v - mu) / jnp.sqrt(var + 1e-6) * g + b

    xn = ln(x, ln1_g[0], ln1_b[0])
    q = xn @ wq
    k = xn @ wk
    v = xn @ wv
    q = q.reshape(B, T, n_head, hs).transpose(0, 2, 1, 3)
    k = k.reshape(B, T, n_head, hs).transpose(0, 2, 1, 3)
    v = v.reshape(B, T, n_head, hs).transpose(0, 2, 1, 3)
    att = jnp.einsum("bhqd,bhkd->bhqk", q, k) / jnp.sqrt(hs)
    att = jax.nn.softmax(att, axis=-1)
    sa = jnp.einsum("bhqk,bhkd->bhqd", att, v).transpose(0, 2, 1, 3).reshape(B, T, C)
    sa = sa @ wo + bo[0]
    x = x + sa
    xn2 = ln(x, ln2_g[0], ln2_b[0])
    ff = jnp.maximum(xn2 @ w1 + b1[0], 0.0) @ w2 + b2[0]
    return x + ff


if __name__ == "__main__":
    # Small shapes consistent with the module: n_embed=32, n_head=4, block_size(seq)=8, batch=2.
    B, T, C, n_head = 2, 8, 32, 4
    hidden = 4 * C

    key = jax.random.PRNGKey(0)
    ks = jax.random.split(key, 10)

    x = jax.random.normal(ks[0], (B, T, C), dtype=jnp.float32)

    def w(k, shape, scale=0.1):
        return (scale * jax.random.normal(k, shape)).astype(jnp.float32)

    params = (
        jnp.ones((1, C), jnp.float32),           # ln1 gamma
        jnp.zeros((1, C), jnp.float32),          # ln1 beta
        w(ks[1], (C, C)),                        # Wq (all heads concatenated)
        w(ks[2], (C, C)),                        # Wk
        w(ks[3], (C, C)),                        # Wv
        w(ks[4], (C, C)),                        # Wo (output projection)
        jnp.zeros((1, C), jnp.float32),          # bo
        jnp.ones((1, C), jnp.float32),           # ln2 gamma
        jnp.zeros((1, C), jnp.float32),          # ln2 beta
        w(ks[5], (C, hidden)),                   # FF W1
        w(ks[6], (1, hidden), 0.02),             # FF b1
        w(ks[7], (hidden, C)),                   # FF W2
        w(ks[8], (1, C), 0.02),                  # FF b2
    )

    prepared = prepare_params(params, n_head=n_head)   # one-time: fuse QKV, fold scale, pack biases
    prepared = jax.block_until_ready(prepared)

    out = encoder_block(x, prepared, n_head=n_head)
    out = jax.block_until_ready(out)

    ref = reference_block(x, params, n_head=n_head)
    # Tolerance accounts for the approximate (EUP) reciprocal in the softmax denom;
    # all other math is exact f32.
    np.testing.assert_allclose(np.asarray(out), np.asarray(ref), rtol=5e-3, atol=5e-3)

    print("KERNEL_OK")
</pallas_src>

<mosaic_0001>
module attributes {stable_mosaic.version = 11 : i64} {
  func.func @encoder_block_kernel(%arg0: i32, %arg1: memref<16x32xf32, #tpu.memory_space<vmem>>, %arg2: memref<8x128xf32, #tpu.memory_space<vmem>>, %arg3: memref<32x96xf32, #tpu.memory_space<vmem>>, %arg4: memref<4x8x32xf32, #tpu.memory_space<vmem>>, %arg5: memref<32x128xf32, #tpu.memory_space<vmem>>, %arg6: memref<128x32xf32, #tpu.memory_space<vmem>>, %arg7: memref<16x32xf32, #tpu.memory_space<vmem>>) attributes {dimension_semantics = [#tpu.dimension_semantics<arbitrary>], iteration_bounds = array<i64: 1>, scalar_prefetch = 0 : i64, scratch_operands = 0 : i64, tpu.core_type = #tpu.core_type<tc>, window_params = [{pipeline_mode = #tpu.pipeline_mode<synchronous>, transform_indices = @transform_0, window_bounds = array<i64: 16, 32>}, {pipeline_mode = #tpu.pipeline_mode<synchronous>, transform_indices = @transform_1, window_bounds = array<i64: 8, 128>}, {pipeline_mode = #tpu.pipeline_mode<synchronous>, transform_indices = @transform_2, window_bounds = array<i64: 32, 96>}, {pipeline_mode = #tpu.pipeline_mode<synchronous>, transform_indices = @transform_3, window_bounds = array<i64: 4, 8, 32>}, {pipeline_mode = #tpu.pipeline_mode<synchronous>, transform_indices = @transform_4, window_bounds = array<i64: 32, 128>}, {pipeline_mode = #tpu.pipeline_mode<synchronous>, transform_indices = @transform_5, window_bounds = array<i64: 128, 32>}, {pipeline_mode = #tpu.pipeline_mode<synchronous>, transform_indices = @transform_6, window_bounds = array<i64: 16, 32>}]} {
    %c0 = arith.constant 0 : index
    %c0_0 = arith.constant 0 : index
    %0 = vector.load %arg1[%c0, %c0_0] : memref<16x32xf32, #tpu.memory_space<vmem>>, vector<16x32xf32>
    %c0_1 = arith.constant 0 : index
    %c0_2 = arith.constant 0 : index
    %1 = vector.load %arg2[%c0_1, %c0_2] : memref<8x128xf32, #tpu.memory_space<vmem>>, vector<8x128xf32>
    %2 = vector.extract_strided_slice %1 {offsets = [0, 0], sizes = [1, 32], strides = [1, 1]} : vector<8x128xf32> to vector<1x32xf32>
    %3 = vector.extract_strided_slice %1 {offsets = [1, 0], sizes = [1, 32], strides = [1, 1]} : vector<8x128xf32> to vector<1x32xf32>
    %4 = vector.extract_strided_slice %1 {offsets = [2, 0], sizes = [1, 32], strides = [1, 1]} : vector<8x128xf32> to vector<1x32xf32>
    %5 = vector.extract_strided_slice %1 {offsets = [3, 0], sizes = [1, 32], strides = [1, 1]} : vector<8x128xf32> to vector<1x32xf32>
    %6 = vector.extract_strided_slice %1 {offsets = [4, 0], sizes = [1, 32], strides = [1, 1]} : vector<8x128xf32> to vector<1x32xf32>
    %7 = vector.extract_strided_slice %1 {offsets = [5, 0], sizes = [1, 32], strides = [1, 1]} : vector<8x128xf32> to vector<1x32xf32>
    %8 = vector.extract_strided_slice %1 {offsets = [6, 0], sizes = [1, 128], strides = [1, 1]} : vector<8x128xf32> to vector<1x128xf32>
    %cst = arith.constant dense<0.000000e+00> : vector<16xf32>
    %9 = vector.multi_reduction <add>, %0, %cst [1] : vector<16x32xf32> to vector<16xf32>
    %10 = vector.shape_cast %9 : vector<16xf32> to vector<16x1xf32>
    %cst_3 = arith.constant 3.200000e+01 : f32
    %11 = vector.broadcast %cst_3 : f32 to vector<16x1xf32>
    %12 = arith.divf %10, %11 : vector<16x1xf32>
    %13 = vector.broadcast %12 : vector<16x1xf32> to vector<16x32xf32>
    %14 = arith.subf %0, %13 : vector<16x32xf32>
    %15 = arith.mulf %14, %14 : vector<16x32xf32>
    %cst_4 = arith.constant dense<0.000000e+00> : vector<16xf32>
    %16 = vector.multi_reduction <add>, %15, %cst_4 [1] : vector<16x32xf32> to vector<16xf32>
    %17 = vector.shape_cast %16 : vector<16xf32> to vector<16x1xf32>
    %cst_5 = arith.constant 3.200000e+01 : f32
    %18 = vector.broadcast %cst_5 : f32 to vector<16x1xf32>
    %19 = arith.divf %17, %18 : vector<16x1xf32>
    %20 = vector.broadcast %12 : vector<16x1xf32> to vector<16x32xf32>
    %21 = arith.subf %0, %20 : vector<16x32xf32>
    %cst_6 = arith.constant 9.99999997E-7 : f32
    %22 = vector.broadcast %cst_6 : f32 to vector<16x1xf32>
    %23 = arith.addf %19, %22 : vector<16x1xf32>
    %24 = math.rsqrt %23 : vector<16x1xf32>
    %25 = vector.broadcast %24 : vector<16x1xf32> to vector<16x32xf32>
    %26 = arith.mulf %21, %25 : vector<16x32xf32>
    %27 = vector.broadcast %2 : vector<1x32xf32> to vector<16x32xf32>
    %28 = arith.mulf %26, %27 : vector<16x32xf32>
    %29 = vector.broadcast %3 : vector<1x32xf32> to vector<16x32xf32>
    %30 = arith.addf %28, %29 : vector<16x32xf32>
    %c0_7 = arith.constant 0 : index
    %c0_8 = arith.constant 0 : index
    %31 = vector.load %arg3[%c0_7, %c0_8] : memref<32x96xf32, #tpu.memory_space<vmem>>, vector<32x96xf32>
    %cst_9 = arith.constant dense<0.000000e+00> : vector<16x96xf32>
    %32 = tpu.matmul %30, %31, %cst_9 {dimension_numbers = #tpu.dot_dimension_numbers<[1], [0], [0], [1], [0, 0, 1, 1], [], []>} : vector<16x32xf32>, vector<32x96xf32>, vector<16x96xf32> -> vector<16x96xf32>
    %33 = vector.extract_strided_slice %32 {offsets = [0, 0], sizes = [16, 8], strides = [1, 1]} : vector<16x96xf32> to vector<16x8xf32>
    %34 = vector.extract_strided_slice %32 {offsets = [0, 8], sizes = [16, 8], strides = [1, 1]} : vector<16x96xf32> to vector<16x8xf32>
    %35 = vector.extract_strided_slice %32 {offsets = [0, 16], sizes = [16, 8], strides = [1, 1]} : vector<16x96xf32> to vector<16x8xf32>
    %36 = vector.extract_strided_slice %32 {offsets = [0, 24], sizes = [16, 8], strides = [1, 1]} : vector<16x96xf32> to vector<16x8xf32>
    %37 = tpu.concatenate %33, %34, %35, %36 in 0 : vector<16x8xf32>, vector<16x8xf32>, vector<16x8xf32>, vector<16x8xf32> -> vector<64x8xf32>
    %38 = vector.shape_cast %37 : vector<64x8xf32> to vector<8x8x8xf32>
    %39 = vector.extract_strided_slice %32 {offsets = [0, 32], sizes = [16, 8], strides = [1, 1]} : vector<16x96xf32> to vector<16x8xf32>
    %40 = vector.extract_strided_slice %32 {offsets = [0, 40], sizes = [16, 8], strides = [1, 1]} : vector<16x96xf32> to vector<16x8xf32>
    %41 = vector.extract_strided_slice %32 {offsets = [0, 48], sizes = [16, 8], strides = [1, 1]} : vector<16x96xf32> to vector<16x8xf32>
    %42 = vector.extract_strided_slice %32 {offsets = [0, 56], sizes = [16, 8], strides = [1, 1]} : vector<16x96xf32> to vector<16x8xf32>
    %43 = tpu.concatenate %39, %40, %41, %42 in 0 : vector<16x8xf32>, vector<16x8xf32>, vector<16x8xf32>, vector<16x8xf32> -> vector<64x8xf32>
    %44 = vector.shape_cast %43 : vector<64x8xf32> to vector<8x8x8xf32>
    %45 = vector.extract_strided_slice %32 {offsets = [0, 64], sizes = [16, 8], strides = [1, 1]} : vector<16x96xf32> to vector<16x8xf32>
    %46 = vector.extract_strided_slice %32 {offsets = [0, 72], sizes = [16, 8], strides = [1, 1]} : vector<16x96xf32> to vector<16x8xf32>
    %47 = vector.extract_strided_slice %32 {offsets = [0, 80], sizes = [16, 8], strides = [1, 1]} : vector<16x96xf32> to vector<16x8xf32>
    %48 = vector.extract_strided_slice %32 {offsets = [0, 88], sizes = [16, 8], strides = [1, 1]} : vector<16x96xf32> to vector<16x8xf32>
    %49 = tpu.concatenate %45, %46, %47, %48 in 0 : vector<16x8xf32>, vector<16x8xf32>, vector<16x8xf32>, vector<16x8xf32> -> vector<64x8xf32>
    %50 = vector.shape_cast %49 : vector<64x8xf32> to vector<8x8x8xf32>
    "tpu.trace_start"() <{level = 10 : i32, message = "nqd,nkd->nqk"}> : () -> ()
    %cst_10 = arith.constant dense<0.000000e+00> : vector<8x8x8xf32>
    %51 = tpu.matmul %38, %44, %cst_10 {dimension_numbers = #tpu.dot_dimension_numbers<[2], [2], [1], [1], [0, 0, 0, 1, 1, 1], [0], [0]>} : vector<8x8x8xf32>, vector<8x8x8xf32>, vector<8x8x8xf32> -> vector<8x8x8xf32>
    "tpu.trace_stop"() : () -> ()
    %cst_11 = arith.constant dense<0xFF800000> : vector<8x8xf32>
    %52 = vector.multi_reduction <maximumf>, %51, %cst_11 [2] : vector<8x8x8xf32> to vector<8x8xf32>
    %53 = vector.shape_cast %52 : vector<8x8xf32> to vector<8x8x1xf32>
    %54 = vector.broadcast %53 : vector<8x8x1xf32> to vector<8x8x8xf32>
    %55 = arith.subf %51, %54 : vector<8x8x8xf32>
    %56 = math.exp %55 : vector<8x8x8xf32>
    %cst_12 = arith.constant dense<0.000000e+00> : vector<8x8xf32>
    %57 = vector.multi_reduction <add>, %56, %cst_12 [2] : vector<8x8x8xf32> to vector<8x8xf32>
    %58 = vector.shape_cast %57 : vector<8x8xf32> to vector<8x8x1xf32>
    %59 = tpu.reciprocal %58 {approx = true} : vector<8x8x1xf32> -> vector<8x8x1xf32>
    %60 = vector.broadcast %59 : vector<8x8x1xf32> to vector<8x8x8xf32>
    %61 = arith.mulf %56, %60 : vector<8x8x8xf32>
    "tpu.trace_start"() <{level = 10 : i32, message = "nqk,nkd->nqd"}> : () -> ()
    %cst_13 = arith.constant dense<0.000000e+00> : vector<8x8x8xf32>
    %62 = tpu.matmul %61, %50, %cst_13 {dimension_numbers = #tpu.dot_dimension_numbers<[2], [1], [1], [2], [0, 0, 0, 1, 1, 2], [0], [0]>} : vector<8x8x8xf32>, vector<8x8x8xf32>, vector<8x8x8xf32> -> vector<8x8x8xf32>
    "tpu.trace_stop"() : () -> ()
    %63 = vector.shape_cast %62 : vector<8x8x8xf32> to vector<4x16x8xf32>
    %c0_14 = arith.constant 0 : index
    %c0_15 = arith.constant 0 : index
    %c0_16 = arith.constant 0 : index
    %64 = vector.load %arg4[%c0_14, %c0_15, %c0_16] : memref<4x8x32xf32, #tpu.memory_space<vmem>>, vector<4x8x32xf32>
    "tpu.trace_start"() <{level = 10 : i32, message = "hnd,hdc->hnc"}> : () -> ()
    %cst_17 = arith.constant dense<0.000000e+00> : vector<4x16x32xf32>
    %65 = tpu.matmul %63, %64, %cst_17 {dimension_numbers = #tpu.dot_dimension_numbers<[2], [1], [1], [2], [0, 0, 0, 1, 1, 2], [0], [0]>} : vector<4x16x8xf32>, vector<4x8x32xf32>, vector<4x16x32xf32> -> vector<4x16x32xf32>
    "tpu.trace_stop"() : () -> ()
    %66 = vector.extract_strided_slice %65 {offsets = [0, 0, 0], sizes = [1, 16, 32], strides = [1, 1, 1]} : vector<4x16x32xf32> to vector<1x16x32xf32>
    %67 = vector.shape_cast %66 : vector<1x16x32xf32> to vector<16x32xf32>
    %68 = vector.extract_strided_slice %65 {offsets = [1, 0, 0], sizes = [1, 16, 32], strides = [1, 1, 1]} : vector<4x16x32xf32> to vector<1x16x32xf32>
    %69 = vector.shape_cast %68 : vector<1x16x32xf32> to vector<16x32xf32>
    %70 = arith.addf %67, %69 : vector<16x32xf32>
    %71 = vector.extract_strided_slice %65 {offsets = [2, 0, 0], sizes = [1, 16, 32], strides = [1, 1, 1]} : vector<4x16x32xf32> to vector<1x16x32xf32>
    %72 = vector.shape_cast %71 : vector<1x16x32xf32> to vector<16x32xf32>
    %73 = arith.addf %70, %72 : vector<16x32xf32>
    %74 = vector.extract_strided_slice %65 {offsets = [3, 0, 0], sizes = [1, 16, 32], strides = [1, 1, 1]} : vector<4x16x32xf32> to vector<1x16x32xf32>
    %75 = vector.shape_cast %74 : vector<1x16x32xf32> to vector<16x32xf32>
    %76 = arith.addf %73, %75 : vector<16x32xf32>
    %77 = arith.addf %0, %76 : vector<16x32xf32>
    %78 = vector.broadcast %4 : vector<1x32xf32> to vector<16x32xf32>
    %79 = arith.addf %77, %78 : vector<16x32xf32>
    %cst_18 = arith.constant dense<0.000000e+00> : vector<16xf32>
    %80 = vector.multi_reduction <add>, %79, %cst_18 [1] : vector<16x32xf32> to vector<16xf32>
    %81 = vector.shape_cast %80 : vector<16xf32> to vector<16x1xf32>
    %cst_19 = arith.constant 3.200000e+01 : f32
    %82 = vector.broadcast %cst_19 : f32 to vector<16x1xf32>
    %83 = arith.divf %81, %82 : vector<16x1xf32>
    %84 = vector.broadcast %83 : vector<16x1xf32> to vector<16x32xf32>
    %85 = arith.subf %79, %84 : vector<16x32xf32>
    %86 = arith.mulf %85, %85 : vector<16x32xf32>
    %cst_20 = arith.constant dense<0.000000e+00> : vector<16xf32>
    %87 = vector.multi_reduction <add>, %86, %cst_20 [1] : vector<16x32xf32> to vector<16xf32>
    %88 = vector.shape_cast %87 : vector<16xf32> to vector<16x1xf32>
    %cst_21 = arith.constant 3.200000e+01 : f32
    %89 = vector.broadcast %cst_21 : f32 to vector<16x1xf32>
    %90 = arith.divf %88, %89 : vector<16x1xf32>
    %91 = vector.broadcast %83 : vector<16x1xf32> to vector<16x32xf32>
    %92 = arith.subf %79, %91 : vector<16x32xf32>
    %cst_22 = arith.constant 9.99999997E-7 : f32
    %93 = vector.broadcast %cst_22 : f32 to vector<16x1xf32>
    %94 = arith.addf %90, %93 : vector<16x1xf32>
    %95 = math.rsqrt %94 : vector<16x1xf32>
    %96 = vector.broadcast %95 : vector<16x1xf32> to vector<16x32xf32>
    %97 = arith.mulf %92, %96 : vector<16x32xf32>
    %98 = vector.broadcast %5 : vector<1x32xf32> to vector<16x32xf32>
    %99 = arith.mulf %97, %98 : vector<16x32xf32>
    %100 = vector.broadcast %6 : vector<1x32xf32> to vector<16x32xf32>
    %101 = arith.addf %99, %100 : vector<16x32xf32>
    %c0_23 = arith.constant 0 : index
    %c0_24 = arith.constant 0 : index
    %102 = vector.load %arg5[%c0_23, %c0_24] : memref<32x128xf32, #tpu.memory_space<vmem>>, vector<32x128xf32>
    %cst_25 = arith.constant dense<0.000000e+00> : vector<16x128xf32>
    %103 = tpu.matmul %101, %102, %cst_25 {dimension_numbers = #tpu.dot_dimension_numbers<[1], [0], [0], [1], [0, 0, 1, 1], [], []>} : vector<16x32xf32>, vector<32x128xf32>, vector<16x128xf32> -> vector<16x128xf32>
    %104 = vector.broadcast %8 : vector<1x128xf32> to vector<16x128xf32>
    %105 = arith.addf %103, %104 : vector<16x128xf32>
    %cst_26 = arith.constant 0.000000e+00 : f32
    %106 = vector.broadcast %cst_26 : f32 to vector<16x128xf32>
    %107 = arith.maximumf %105, %106 : vector<16x128xf32>
    %c0_27 = arith.constant 0 : index
    %c0_28 = arith.constant 0 : index
    %108 = vector.load %arg6[%c0_27, %c0_28] : memref<128x32xf32, #tpu.memory_space<vmem>>, vector<128x32xf32>
    %cst_29 = arith.constant dense<0.000000e+00> : vector<16x32xf32>
    %109 = tpu.matmul %107, %108, %cst_29 {dimension_numbers = #tpu.dot_dimension_numbers<[1], [0], [0], [1], [0, 0, 1, 1], [], []>} : vector<16x128xf32>, vector<128x32xf32>, vector<16x32xf32> -> vector<16x32xf32>
    %110 = vector.broadcast %7 : vector<1x32xf32> to vector<16x32xf32>
    %111 = arith.addf %109, %110 : vector<16x32xf32>
    %112 = arith.addf %79, %111 : vector<16x32xf32>
    %c0_30 = arith.constant 0 : index
    %c0_31 = arith.constant 0 : index
    %113 = vector.load %arg7[%c0_30, %c0_31] : memref<16x32xf32, #tpu.memory_space<vmem>>, vector<16x32xf32>
    tpu.vector_store %arg7[%c0_30, %c0_31], %112 {strides = array<i32>} : memref<16x32xf32, #tpu.memory_space<vmem>>, vector<16x32xf32>,
    return
  }
  func.func @transform_0(%arg0: i32) -> (i32, i32) {
    %c0_i32 = arith.constant 0 : i32
    %c0_i32_0 = arith.constant 0 : i32
    %c0_i32_1 = arith.constant 0 : i32
    return %c0_i32, %c0_i32_0 : i32, i32
  }
  func.func @transform_1(%arg0: i32) -> (i32, i32) {
    %c0_i32 = arith.constant 0 : i32
    %c0_i32_0 = arith.constant 0 : i32
    %c0_i32_1 = arith.constant 0 : i32
    return %c0_i32, %c0_i32_0 : i32, i32
  }
  func.func @transform_2(%arg0: i32) -> (i32, i32) {
    %c0_i32 = arith.constant 0 : i32
    %c0_i32_0 = arith.constant 0 : i32
    %c0_i32_1 = arith.constant 0 : i32
    return %c0_i32, %c0_i32_0 : i32, i32
  }
  func.func @transform_3(%arg0: i32) -> (i32, i32, i32) {
    %c0_i32 = arith.constant 0 : i32
    %c0_i32_0 = arith.constant 0 : i32
    %c0_i32_1 = arith.constant 0 : i32
    %c0_i32_2 = arith.constant 0 : i32
    return %c0_i32, %c0_i32_0, %c0_i32_1 : i32, i32, i32
  }
  func.func @transform_4(%arg0: i32) -> (i32, i32) {
    %c0_i32 = arith.constant 0 : i32
    %c0_i32_0 = arith.constant 0 : i32
    %c0_i32_1 = arith.constant 0 : i32
    return %c0_i32, %c0_i32_0 : i32, i32
  }
  func.func @transform_5(%arg0: i32) -> (i32, i32) {
    %c0_i32 = arith.constant 0 : i32
    %c0_i32_0 = arith.constant 0 : i32
    %c0_i32_1 = arith.constant 0 : i32
    return %c0_i32, %c0_i32_0 : i32, i32
  }
  func.func @transform_6(%arg0: i32) -> (i32, i32) {
    %c0_i32 = arith.constant 0 : i32
    %c0_i32_0 = arith.constant 0 : i32
    %c0_i32_1 = arith.constant 0 : i32
    return %c0_i32, %c0_i32_0 : i32, i32
  }
}

</mosaic_0001>

<llo_original>
// kernel: tpu_custom_call.1
$region0: #{tpu_custom_call.1}
  #allocation0 [shape = 'u32[]', space=smem, size = 0x4, offset = 0x4, fixed_abs, tag = 'smem constant byte address 0x4 - core index']
  #allocation1 [shape = 'u32[144,128]{1,0:T(1,128)}', space=vmem, size = 0x12000, scoped, tag = 'internal scratch']
  %s0 = inlined_call_operand.vmem [shape: f32[16,32], index: 0, kind: input, shape index: {}]
  %s1 = inlined_call_operand.vmem [shape: f32[8,128], index: 1, kind: input, shape index: {}]
  %s2 = inlined_call_operand.vmem [shape: f32[32,96], index: 2, kind: input, shape index: {}]
  %s3 = inlined_call_operand.vmem [shape: f32[4,8,32], index: 3, kind: input, shape index: {}]
  %s4 = inlined_call_operand.vmem [shape: f32[32,128], index: 4, kind: input, shape index: {}]
  %s5 = inlined_call_operand.vmem [shape: f32[128,32], index: 5, kind: input, shape index: {}]
  %s6 = inlined_call_operand.hbm [shape: f32[16,32], index: 6, kind: output, shape index: {}]
  %s7 = sld [smem:[#allocation0]]
  $region34: #{tpu_custom_call.1} parent=0
    _
  %s9 = ssub.s32 1, %s7
  %s10 = scalar_select 0, %s9, %s7
  $region1: #{tpu_custom_call.1} parent=0
    #allocation2 [shape = 'u8[8192]{0}', space=vmem, size = 0x2000, scoped, tag = 'output window, operand 0, single buffered']
    #allocation3 [shape = 's32[1]{0}', space=sflag, size = 0x4, scoped, tag = 'scoped memory for tpu_custom_call.1']
    %11 = vsyncpa [#allocation3], 0
    // Predicated region
    $region2: #{tpu_custom_call.1} parent=1 // pred_check
      _
    $region3: #{tpu_custom_call.1} parent=1 // pred_check_branch
      %13 = sbr.rel (0) target = $region5
    $region4: #{tpu_custom_call.1} parent=1 // pred_region
      _
    $region5: #{tpu_custom_call.1} parent=1 // pred_fallthru
      _
    // Predicated region
    $region6: #{tpu_custom_call.1} parent=1 // pred_check
      _
    $region7: #{tpu_custom_call.1} parent=1 // pred_check_branch
      %15 = sbr.rel (0) target = $region9
    $region8: #{tpu_custom_call.1} parent=1 // pred_region
      _
    $region9: #{tpu_custom_call.1} parent=1 // pred_fallthru
      _
    // Predicated region
    $region10: #{tpu_custom_call.1} parent=1 // pred_check
      _
    $region11: #{tpu_custom_call.1} parent=1 // pred_check_branch
      %17 = sbr.rel (0) target = $region13
    $region12: #{tpu_custom_call.1} parent=1 // pred_region
      _
    $region13: #{tpu_custom_call.1} parent=1 // pred_fallthru
      _
    // Predicated region
    $region14: #{tpu_custom_call.1} parent=1 // pred_check
      _
    $region15: #{tpu_custom_call.1} parent=1 // pred_check_branch
      %19 = sbr.rel (0) target = $region17
    $region16: #{tpu_custom_call.1} parent=1 // pred_region
      _
    $region17: #{tpu_custom_call.1} parent=1 // pred_fallthru
      _
    // Predicated region
    $region18: #{tpu_custom_call.1} parent=1 // pred_check
      _
    $region19: #{tpu_custom_call.1} parent=1 // pred_check_branch
      %21 = sbr.rel (0) target = $region21
    $region20: #{tpu_custom_call.1} parent=1 // pred_region
      _
    $region21: #{tpu_custom_call.1} parent=1 // pred_fallthru
      _
    // Predicated region
    $region22: #{tpu_custom_call.1} parent=1 // pred_check
      _
    $region23: #{tpu_custom_call.1} parent=1 // pred_check_branch
      %23 = sbr.rel (0) target = $region25
    $region24: #{tpu_custom_call.1} parent=1 // pred_region
      _
    $region25: #{tpu_custom_call.1} parent=1 // pred_fallthru
      _
    %v24 = vld [vmem:[%s0] sm:$0xff]
    %v25 = vld [vmem:[%s0 + $0x8] sm:$0xff]
    %v26 = vld [vmem:[%s1] sm:$0xff]
    %vm27 = vcmask 261120
    %v28 = vsel %vm27, %v24, 0.0
    %29 = vadd.xlane.f32.xlu0 %v28
    %v30 = vpop.xlane.xlu0 %29
    %v31 = vsel %vm27, %v25, 0.0
    %32 = vadd.xlane.f32.xlu0 %v31
    %v33 = vpop.xlane.xlu0 %32
    %v34 = vrcp.pop 32.0
    %v35 = vmul.f32 %v30, %v34
    %v36 = vmul.f32 %v33, %v34
    %v37 = vsub.f32 %v24, %v35
    %v38 = vsub.f32 %v25, %v36
    %v39 = vmul.f32 %v37, %v37
    %v40 = vmul.f32 %v38, %v38
    %v41 = vsel %vm27, %v39, 0.0
    %42 = vadd.xlane.f32.xlu0 %v41
    %v43 = vpop.xlane.xlu0 %42
    %v44 = vsel %vm27, %v40, 0.0
    %45 = vadd.xlane.f32.xlu0 %v44
    %v46 = vpop.xlane.xlu0 %45
    %v47 = vmul.f32 %v43, %v34
    %v48 = vmul.f32 %v46, %v34
    %v49 = vadd.f32 %v47, 1e-06
    %v50 = vadd.f32 %v48, 1e-06
    %v51 = vrsqrt.pop %v49
    %v52 = vrsqrt.pop %v50
    %v53 = vmul.f32 %v37, %v51
    %v54 = vmul.f32 %v38, %v52
    %v55 = vlaneseq
    %v56 = vshrl.u32 %v55, 7
    %v57 = vsub.s32 0, %v56
    %v58 = vrot.slane %v26, %v57
    %v59 = vmul.f32 %v53, %v58
    %v60 = vmul.f32 %v54, %v58
    %v61 = vlaneseq
    %v62 = vshrl.u32 %v61, 7
    %v63 = vsub.s32 1, %v62
    %v64 = vrot.slane %v26, %v63
    %v65 = vadd.f32 %v59, %v64
    %v66 = vadd.f32 %v60, %v64
    %v67 = vld [vmem:[%s2] sm:$0xff]
    %v68 = vld [vmem:[%s2 + $0x8] sm:$0xff]
    %v69 = vld [vmem:[%s2 + $0x10] sm:$0xff]
    %v70 = vld [vmem:[%s2 + $0x18] sm:$0xff]
    %v72 = vsel %vm27, %v65, 0
    %v75 = vsel %vm27, %v66, 0
    %77 = vmatprep.subr.mxu0 0.0
    %78 = vmatpush1.msra.mxu0 %v67
    %79 = vmatprep.subr.mxu0 0.0
    %80 = vmatpush1.msra.mxu0 %v68
    %81 = vmatprep.subr.mxu0 0.0
    %82 = vmatpush1.msra.mxu0 %v69
    %83 = vmatprep.subr.mxu0 0.0
    %84 = vmatpush1.msra.mxu0 %v70
    %85 = vmatprep.subr.mxu0 0.0
    %86 = vmatpush1.msra.mxu0 0.0
    %87 = vmatprep.subr.mxu0 0.0
    %88 = vmatpush1.msra.mxu0 0.0
    %89 = vmatprep.subr.mxu0 0.0
    %90 = vmatpush1.msra.mxu0 0.0
    %91 = vmatprep.subr.mxu0 0.0
    %92 = vmatpush1.msra.mxu0 0.0
    %93 = vmatprep.subr.mxu0 0.0
    %94 = vmatpush1.msra.mxu0 0.0
    %95 = vmatprep.subr.mxu0 0.0
    %96 = vmatpush1.msra.mxu0 0.0
    %97 = vmatprep.subr.mxu0 0.0
    %98 = vmatpush1.msra.mxu0 0.0
    %99 = vmatprep.subr.mxu0 0.0
    %100 = vmatpush1.msra.mxu0 0.0
    %101 = vmatprep.subr.mxu0 0.0
    %102 = vmatpush1.msra.mxu0 0.0
    %103 = vmatprep.subr.mxu0 0.0
    %104 = vmatpush1.msra.mxu0 0.0
    %105 = vmatprep.subr.mxu0 0.0
    %106 = vmatpush1.msra.mxu0 0.0
    %107 = vmatprep.subr.mxu0 0.0
    %108 = vmatpush1.msra.mxu0 0.0
    %109 = vmatprep.subr.mxu0 0.0
    %110 = vmatpush1.msra.mxu0 0.0
    %111 = vmatprep.subr.mxu0 0.0
    %112 = vmatpush1.msra.mxu0 0.0
    %113 = vmatprep.subr.mxu0 0.0
    %114 = vmatpush1.msra.mxu0 0.0
    %115 = vmatprep.subr.mxu0 0.0
    %116 = vmatpush1.msra.mxu0 0.0
    %117 = vmatprep.subr.mxu0 0.0
    %118 = vmatpush1.msra.mxu0 0.0
    %119 = vmatprep.subr.mxu0 0.0
    %120 = vmatpush1.msra.mxu0 0.0
    %121 = vmatprep.subr.mxu0 0.0
    %122 = vmatpush1.msra.mxu0 0.0
    %123 = vmatprep.subr.mxu0 0.0
    %124 = vmatpush1.msra.mxu0 0.0
    %125 = vmatprep.subr.mxu0 0.0
    %126 = vmatpush1.msra.mxu0 0.0
    %127 = vmatprep.subr.mxu0 0.0
    %128 = vmatpush1.msra.mxu0 0.0
    %129 = vmatprep.subr.mxu0 0.0
    %130 = vmatpush1.msra.mxu0 0.0
    %131 = vmatprep.subr.mxu0 0.0
    %132 = vmatpush1.msra.mxu0 0.0
    %133 = vmatprep.subr.mxu0 0.0
    %134 = vmatpush1.msra.mxu0 0.0
    %135 = vmatprep.subr.mxu0 0.0
    %136 = vmatpush1.msra.mxu0 0.0
    %137 = vmatprep.subr.mxu0 0.0
    %138 = vmatpush1.msra.mxu0 0.0
    %139 = vmatprep.subr.mxu0 0.0
    %140 = vmatpush1.msra.mxu0 0.0
    %141 = vmatprep.mubr.f32.mxu0 0.0
    %142 = vmatmul.mubr.f32.gmra.mrb[0].mxu0 %v72
    %v143 = vpop.f32.mrb[0].mxu0
    %v144 = vadd.f32 0.0, %v143
    %v145 = vpop.f32.mrb[0].mxu0
    %146 = vmatprep.mubr.f32.mxu0 0.0
    %147 = vmatmul.mubr.f32.gmra.mrb[0].mxu0 %v75
    %v148 = vpop.f32.mrb[0].mxu0
    %v149 = vadd.f32 0.0, %v148
    %v150 = vpop.f32.mrb[0].mxu0
    %151 = vdwg.mxu0
    %154 = vrot.lane.b32.xlu0 %v144, 120
    %v155 = vpop.permute.xlu0 %154
    %156 = vrot.lane.b32.xlu0 %v149, 120
    %v157 = vpop.permute.xlu0 %156
    %158 = vrot.lane.b32.xlu0 %v144, 112
    %v159 = vpop.permute.xlu0 %158
    %160 = vrot.lane.b32.xlu0 %v149, 112
    %v161 = vpop.permute.xlu0 %160
    %162 = vrot.lane.b32.xlu0 %v144, 104
    %v163 = vpop.permute.xlu0 %162
    %164 = vrot.lane.b32.xlu0 %v149, 104
    %v165 = vpop.permute.xlu0 %164
    %166 = vrot.lane.b32.xlu0 %v144, 96
    %v167 = vpop.permute.xlu0 %166
    %vm168 = vcmask 64512
    %v169 = vsel %vm168, %v144, 0
    %v171 = vsel %vm168, %v167, 0
    %173 = vmatprep.subr.mxu0 0.0
    %174 = vmatpush1.xpose.msra.mxu0 %v171
    %175 = vmatprep.subr.mxu0 0.0
    %176 = vmatpush1.xpose.msra.mxu0 0.0
    %177 = vmatprep.subr.mxu0 0.0
    %178 = vmatpush1.xpose.msra.mxu0 0.0
    %179 = vmatprep.subr.mxu0 0.0
    %180 = vmatpush1.xpose.msra.mxu0 0.0
    %181 = vmatprep.subr.mxu0 0.0
    %182 = vmatpush1.xpose.msra.mxu0 0.0
    %183 = vmatprep.subr.mxu0 0.0
    %184 = vmatpush1.xpose.msra.mxu0 0.0
    %185 = vmatprep.subr.mxu0 0.0
    %186 = vmatpush1.xpose.msra.mxu0 0.0
    %187 = vmatprep.subr.mxu0 0.0
    %188 = vmatpush1.xpose.msra.mxu0 0.0
    %189 = vmatprep.subr.mxu0 0.0
    %190 = vmatpush1.xpose.msra.mxu0 0.0
    %191 = vmatprep.subr.mxu0 0.0
    %192 = vmatpush1.xpose.msra.mxu0 0.0
    %193 = vmatprep.subr.mxu0 0.0
    %194 = vmatpush1.xpose.msra.mxu0 0.0
    %195 = vmatprep.subr.mxu0 0.0
    %196 = vmatpush1.xpose.msra.mxu0 0.0
    %197 = vmatprep.subr.mxu0 0.0
    %198 = vmatpush1.xpose.msra.mxu0 0.0
    %199 = vmatprep.subr.mxu0 0.0
    %200 = vmatpush1.xpose.msra.mxu0 0.0
    %201 = vmatprep.subr.mxu0 0.0
    %202 = vmatpush1.xpose.msra.mxu0 0.0
    %203 = vmatprep.subr.mxu0 0.0
    %204 = vmatpush1.xpose.msra.mxu0 0.0
    %205 = vmatprep.subr.mxu0 0.0
    %206 = vmatpush1.xpose.msra.mxu0 0.0
    %207 = vmatprep.subr.mxu0 0.0
    %208 = vmatpush1.xpose.msra.mxu0 0.0
    %209 = vmatprep.subr.mxu0 0.0
    %210 = vmatpush1.xpose.msra.mxu0 0.0
    %211 = vmatprep.subr.mxu0 0.0
    %212 = vmatpush1.xpose.msra.mxu0 0.0
    %213 = vmatprep.subr.mxu0 0.0
    %214 = vmatpush1.xpose.msra.mxu0 0.0
    %215 = vmatprep.subr.mxu0 0.0
    %216 = vmatpush1.xpose.msra.mxu0 0.0
    %217 = vmatprep.subr.mxu0 0.0
    %218 = vmatpush1.xpose.msra.mxu0 0.0
    %219 = vmatprep.subr.mxu0 0.0
    %220 = vmatpush1.xpose.msra.mxu0 0.0
    %221 = vmatprep.subr.mxu0 0.0
    %222 = vmatpush1.xpose.msra.mxu0 0.0
    %223 = vmatprep.subr.mxu0 0.0
    %224 = vmatpush1.xpose.msra.mxu0 0.0
    %225 = vmatprep.subr.mxu0 0.0
    %226 = vmatpush1.xpose.msra.mxu0 0.0
    %227 = vmatprep.subr.mxu0 0.0
    %228 = vmatpush1.xpose.msra.mxu0 0.0
    %229 = vmatprep.subr.mxu0 0.0
    %230 = vmatpush1.xpose.msra.mxu0 0.0
    %231 = vmatprep.subr.mxu0 0.0
    %232 = vmatpush1.xpose.msra.mxu0 0.0
    %233 = vmatprep.subr.mxu0 0.0
    %234 = vmatpush1.xpose.msra.mxu0 0.0
    %235 = vmatprep.subr.mxu0 0.0
    %236 = vmatpush1.xpose.msra.mxu0 0.0
    %237 = vmatprep.mubr.f32.mxu0 0.0
    %238 = vmatmul.mubr.f32.gmra.mrb[0].mxu0 %v169
    %v239 = vpop.f32.mrb[0].mxu0
    %v240 = vadd.f32 0.0, %v239
    %v241 = vpop.f32.mrb[0].mxu0
    %242 = vdwg.mxu0
    %243 = vrot.lane.b32.xlu0 %v149, 96
    %v244 = vpop.permute.xlu0 %243
    %v245 = vsel %vm168, %v149, 0
    %v247 = vsel %vm168, %v244, 0
    %249 = vmatprep.subr.mxu0 0.0
    %250 = vmatpush1.xpose.msra.mxu0 %v247
    %251 = vmatprep.subr.mxu0 0.0
    %252 = vmatpush1.xpose.msra.mxu0 0.0
    %253 = vmatprep.subr.mxu0 0.0
    %254 = vmatpush1.xpose.msra.mxu0 0.0
    %255 = vmatprep.subr.mxu0 0.0
    %256 = vmatpush1.xpose.msra.mxu0 0.0
    %257 = vmatprep.subr.mxu0 0.0
    %258 = vmatpush1.xpose.msra.mxu0 0.0
    %259 = vmatprep.subr.mxu0 0.0
    %260 = vmatpush1.xpose.msra.mxu0 0.0
    %261 = vmatprep.subr.mxu0 0.0
    %262 = vmatpush1.xpose.msra.mxu0 0.0
    %263 = vmatprep.subr.mxu0 0.0
    %264 = vmatpush1.xpose.msra.mxu0 0.0
    %265 = vmatprep.subr.mxu0 0.0
    %266 = vmatpush1.xpose.msra.mxu0 0.0
    %267 = vmatprep.subr.mxu0 0.0
    %268 = vmatpush1.xpose.msra.mxu0 0.0
    %269 = vmatprep.subr.mxu0 0.0
    %270 = vmatpush1.xpose.msra.mxu0 0.0
    %271 = vmatprep.subr.mxu0 0.0
    %272 = vmatpush1.xpose.msra.mxu0 0.0
    %273 = vmatprep.subr.mxu0 0.0
    %274 = vmatpush1.xpose.msra.mxu0 0.0
    %275 = vmatprep.subr.mxu0 0.0
    %276 = vmatpush1.xpose.msra.mxu0 0.0
    %277 = vmatprep.subr.mxu0 0.0
    %278 = vmatpush1.xpose.msra.mxu0 0.0
    %279 = vmatprep.subr.mxu0 0.0
    %280 = vmatpush1.xpose.msra.mxu0 0.0
    %281 = vmatprep.subr.mxu0 0.0
    %282 = vmatpush1.xpose.msra.mxu0 0.0
    %283 = vmatprep.subr.mxu0 0.0
    %284 = vmatpush1.xpose.msra.mxu0 0.0
    %285 = vmatprep.subr.mxu0 0.0
    %286 = vmatpush1.xpose.msra.mxu0 0.0
    %287 = vmatprep.subr.mxu0 0.0
    %288 = vmatpush1.xpose.msra.mxu0 0.0
    %289 = vmatprep.subr.mxu0 0.0
    %290 = vmatpush1.xpose.msra.mxu0 0.0
    %291 = vmatprep.subr.mxu0 0.0
    %292 = vmatpush1.xpose.msra.mxu0 0.0
    %293 = vmatprep.subr.mxu0 0.0
    %294 = vmatpush1.xpose.msra.mxu0 0.0
    %295 = vmatprep.subr.mxu0 0.0
    %296 = vmatpush1.xpose.msra.mxu0 0.0
    %297 = vmatprep.subr.mxu0 0.0
    %298 = vmatpush1.xpose.msra.mxu0 0.0
    %299 = vmatprep.subr.mxu0 0.0
    %300 = vmatpush1.xpose.msra.mxu0 0.0
    %301 = vmatprep.subr.mxu0 0.0
    %302 = vmatpush1.xpose.msra.mxu0 0.0
    %303 = vmatprep.subr.mxu0 0.0
    %304 = vmatpush1.xpose.msra.mxu0 0.0
    %305 = vmatprep.subr.mxu0 0.0
    %306 = vmatpush1.xpose.msra.mxu0 0.0
    %307 = vmatprep.subr.mxu0 0.0
    %308 = vmatpush1.xpose.msra.mxu0 0.0
    %309 = vmatprep.subr.mxu0 0.0
    %310 = vmatpush1.xpose.msra.mxu0 0.0
    %311 = vmatprep.subr.mxu0 0.0
    %312 = vmatpush1.xpose.msra.mxu0 0.0
    %313 = vmatprep.mubr.f32.mxu0 0.0
    %314 = vmatmul.mubr.f32.gmra.mrb[0].mxu0 %v245
    %v315 = vpop.f32.mrb[0].mxu0
    %v316 = vadd.f32 0.0, %v315
    %v317 = vpop.f32.mrb[0].mxu0
    %318 = vdwg.mxu0
    %319 = vrot.lane.b32.xlu0 %v155, 96
    %v320 = vpop.permute.xlu0 %319
    %v321 = vsel %vm168, %v155, 0
    %v323 = vsel %vm168, %v320, 0
    %325 = vmatprep.subr.mxu0 0.0
    %326 = vmatpush1.xpose.msra.mxu0 %v323
    %327 = vmatprep.subr.mxu0 0.0
    %328 = vmatpush1.xpose.msra.mxu0 0.0
    %329 = vmatprep.subr.mxu0 0.0
    %330 = vmatpush1.xpose.msra.mxu0 0.0
    %331 = vmatprep.subr.mxu0 0.0
    %332 = vmatpush1.xpose.msra.mxu0 0.0
    %333 = vmatprep.subr.mxu0 0.0
    %334 = vmatpush1.xpose.msra.mxu0 0.0
    %335 = vmatprep.subr.mxu0 0.0
    %336 = vmatpush1.xpose.msra.mxu0 0.0
    %337 = vmatprep.subr.mxu0 0.0
    %338 = vmatpush1.xpose.msra.mxu0 0.0
    %339 = vmatprep.subr.mxu0 0.0
    %340 = vmatpush1.xpose.msra.mxu0 0.0
    %341 = vmatprep.subr.mxu0 0.0
    %342 = vmatpush1.xpose.msra.mxu0 0.0
    %343 = vmatprep.subr.mxu0 0.0
    %344 = vmatpush1.xpose.msra.mxu0 0.0
    %345 = vmatprep.subr.mxu0 0.0
    %346 = vmatpush1.xpose.msra.mxu0 0.0
    %347 = vmatprep.subr.mxu0 0.0
    %348 = vmatpush1.xpose.msra.mxu0 0.0
    %349 = vmatprep.subr.mxu0 0.0
    %350 = vmatpush1.xpose.msra.mxu0 0.0
    %351 = vmatprep.subr.mxu0 0.0
    %352 = vmatpush1.xpose.msra.mxu0 0.0
    %353 = vmatprep.subr.mxu0 0.0
    %354 = vmatpush1.xpose.msra.mxu0 0.0
    %355 = vmatprep.subr.mxu0 0.0
    %356 = vmatpush1.xpose.msra.mxu0 0.0
    %357 = vmatprep.subr.mxu0 0.0
    %358 = vmatpush1.xpose.msra.mxu0 0.0
    %359 = vmatprep.subr.mxu0 0.0
    %360 = vmatpush1.xpose.msra.mxu0 0.0
    %361 = vmatprep.subr.mxu0 0.0
    %362 = vmatpush1.xpose.msra.mxu0 0.0
    %363 = vmatprep.subr.mxu0 0.0
    %364 = vmatpush1.xpose.msra.mxu0 0.0
    %365 = vmatprep.subr.mxu0 0.0
    %366 = vmatpush1.xpose.msra.mxu0 0.0
    %367 = vmatprep.subr.mxu0 0.0
    %368 = vmatpush1.xpose.msra.mxu0 0.0
    %369 = vmatprep.subr.mxu0 0.0
    %370 = vmatpush1.xpose.msra.mxu0 0.0
    %371 = vmatprep.subr.mxu0 0.0
    %372 = vmatpush1.xpose.msra.mxu0 0.0
    %373 = vmatprep.subr.mxu0 0.0
    %374 = vmatpush1.xpose.msra.mxu0 0.0
    %375 = vmatprep.subr.mxu0 0.0
    %376 = vmatpush1.xpose.msra.mxu0 0.0
    %377 = vmatprep.subr.mxu0 0.0
    %378 = vmatpush1.xpose.msra.mxu0 0.0
    %379 = vmatprep.subr.mxu0 0.0
    %380 = vmatpush1.xpose.msra.mxu0 0.0
    %381 = vmatprep.subr.mxu0 0.0
    %382 = vmatpush1.xpose.msra.mxu0 0.0
    %383 = vmatprep.subr.mxu0 0.0
    %384 = vmatpush1.xpose.msra.mxu0 0.0
    %385 = vmatprep.subr.mxu0 0.0
    %386 = vmatpush1.xpose.msra.mxu0 0.0
    %387 = vmatprep.subr.mxu0 0.0
    %388 = vmatpush1.xpose.msra.mxu0 0.0
    %389 = vmatprep.mubr.f32.mxu0 0.0
    %390 = vmatmul.mubr.f32.gmra.mrb[0].mxu0 %v321
    %v391 = vpop.f32.mrb[0].mxu0
    %v392 = vadd.f32 0.0, %v391
    %v393 = vpop.f32.mrb[0].mxu0
    %394 = vdwg.mxu0
    %395 = vrot.lane.b32.xlu0 %v157, 96
    %v396 = vpop.permute.xlu0 %395
    %v397 = vsel %vm168, %v157, 0
    %v399 = vsel %vm168, %v396, 0
    %401 = vmatprep.subr.mxu0 0.0
    %402 = vmatpush1.xpose.msra.mxu0 %v399
    %403 = vmatprep.subr.mxu0 0.0
    %404 = vmatpush1.xpose.msra.mxu0 0.0
    %405 = vmatprep.subr.mxu0 0.0
    %406 = vmatpush1.xpose.msra.mxu0 0.0
    %407 = vmatprep.subr.mxu0 0.0
    %408 = vmatpush1.xpose.msra.mxu0 0.0
    %409 = vmatprep.subr.mxu0 0.0
    %410 = vmatpush1.xpose.msra.mxu0 0.0
    %411 = vmatprep.subr.mxu0 0.0
    %412 = vmatpush1.xpose.msra.mxu0 0.0
    %413 = vmatprep.subr.mxu0 0.0
    %414 = vmatpush1.xpose.msra.mxu0 0.0
    %415 = vmatprep.subr.mxu0 0.0
    %416 = vmatpush1.xpose.msra.mxu0 0.0
    %417 = vmatprep.subr.mxu0 0.0
    %418 = vmatpush1.xpose.msra.mxu0 0.0
    %419 = vmatprep.subr.mxu0 0.0
    %420 = vmatpush1.xpose.msra.mxu0 0.0
    %421 = vmatprep.subr.mxu0 0.0
    %422 = vmatpush1.xpose.msra.mxu0 0.0
    %423 = vmatprep.subr.mxu0 0.0
    %424 = vmatpush1.xpose.msra.mxu0 0.0
    %425 = vmatprep.subr.mxu0 0.0
    %426 = vmatpush1.xpose.msra.mxu0 0.0
    %427 = vmatprep.subr.mxu0 0.0
    %428 = vmatpush1.xpose.msra.mxu0 0.0
    %429 = vmatprep.subr.mxu0 0.0
    %430 = vmatpush1.xpose.msra.mxu0 0.0
    %431 = vmatprep.subr.mxu0 0.0
    %432 = vmatpush1.xpose.msra.mxu0 0.0
    %433 = vmatprep.subr.mxu0 0.0
    %434 = vmatpush1.xpose.msra.mxu0 0.0
    %435 = vmatprep.subr.mxu0 0.0
    %436 = vmatpush1.xpose.msra.mxu0 0.0
    %437 = vmatprep.subr.mxu0 0.0
    %438 = vmatpush1.xpose.msra.mxu0 0.0
    %439 = vmatprep.subr.mxu0 0.0
    %440 = vmatpush1.xpose.msra.mxu0 0.0
    %441 = vmatprep.subr.mxu0 0.0
    %442 = vmatpush1.xpose.msra.mxu0 0.0
    %443 = vmatprep.subr.mxu0 0.0
    %444 = vmatpush1.xpose.msra.mxu0 0.0
    %445 = vmatprep.subr.mxu0 0.0
    %446 = vmatpush1.xpose.msra.mxu0 0.0
    %447 = vmatprep.subr.mxu0 0.0
    %448 = vmatpush1.xpose.msra.mxu0 0.0
    %449 = vmatprep.subr.mxu0 0.0
    %450 = vmatpush1.xpose.msra.mxu0 0.0
    %451 = vmatprep.subr.mxu0 0.0
    %452 = vmatpush1.xpose.msra.mxu0 0.0
    %453 = vmatprep.subr.mxu0 0.0
    %454 = vmatpush1.xpose.msra.mxu0 0.0
    %455 = vmatprep.subr.mxu0 0.0
    %456 = vmatpush1.xpose.msra.mxu0 0.0
    %457 = vmatprep.subr.mxu0 0.0
    %458 = vmatpush1.xpose.msra.mxu0 0.0
    %459 = vmatprep.subr.mxu0 0.0
    %460 = vmatpush1.xpose.msra.mxu0 0.0
    %461 = vmatprep.subr.mxu0 0.0
    %462 = vmatpush1.xpose.msra.mxu0 0.0
    %463 = vmatprep.subr.mxu0 0.0
    %464 = vmatpush1.xpose.msra.mxu0 0.0
    %465 = vmatprep.mubr.f32.mxu0 0.0
    %466 = vmatmul.mubr.f32.gmra.mrb[0].mxu0 %v397
    %v467 = vpop.f32.mrb[0].mxu0
    %v468 = vadd.f32 0.0, %v467
    %v469 = vpop.f32.mrb[0].mxu0
    %470 = vdwg.mxu0
    %471 = vrot.lane.b32.xlu0 %v159, 96
    %v472 = vpop.permute.xlu0 %471
    %v473 = vsel %vm168, %v159, 0
    %v475 = vsel %vm168, %v472, 0
    %477 = vmatprep.subr.mxu0 0.0
    %478 = vmatpush1.xpose.msra.mxu0 %v475
    %479 = vmatprep.subr.mxu0 0.0
    %480 = vmatpush1.xpose.msra.mxu0 0.0
    %481 = vmatprep.subr.mxu0 0.0
    %482 = vmatpush1.xpose.msra.mxu0 0.0
    %483 = vmatprep.subr.mxu0 0.0
    %484 = vmatpush1.xpose.msra.mxu0 0.0
    %485 = vmatprep.subr.mxu0 0.0
    %486 = vmatpush1.xpose.msra.mxu0 0.0
    %487 = vmatprep.subr.mxu0 0.0
    %488 = vmatpush1.xpose.msra.mxu0 0.0
    %489 = vmatprep.subr.mxu0 0.0
    %490 = vmatpush1.xpose.msra.mxu0 0.0
    %491 = vmatprep.subr.mxu0 0.0
    %492 = vmatpush1.xpose.msra.mxu0 0.0
    %493 = vmatprep.subr.mxu0 0.0
    %494 = vmatpush1.xpose.msra.mxu0 0.0
    %495 = vmatprep.subr.mxu0 0.0
    %496 = vmatpush1.xpose.msra.mxu0 0.0
    %497 = vmatprep.subr.mxu0 0.0
    %498 = vmatpush1.xpose.msra.mxu0 0.0
    %499 = vmatprep.subr.mxu0 0.0
    %500 = vmatpush1.xpose.msra.mxu0 0.0
    %501 = vmatprep.subr.mxu0 0.0
    %502 = vmatpush1.xpose.msra.mxu0 0.0
    %503 = vmatprep.subr.mxu0 0.0
    %504 = vmatpush1.xpose.msra.mxu0 0.0
    %505 = vmatprep.subr.mxu0 0.0
    %506 = vmatpush1.xpose.msra.mxu0 0.0
    %507 = vmatprep.subr.mxu0 0.0
    %508 = vmatpush1.xpose.msra.mxu0 0.0
    %509 = vmatprep.subr.mxu0 0.0
    %510 = vmatpush1.xpose.msra.mxu0 0.0
    %511 = vmatprep.subr.mxu0 0.0
    %512 = vmatpush1.xpose.msra.mxu0 0.0
    %513 = vmatprep.subr.mxu0 0.0
    %514 = vmatpush1.xpose.msra.mxu0 0.0
    %515 = vmatprep.subr.mxu0 0.0
    %516 = vmatpush1.xpose.msra.mxu0 0.0
    %517 = vmatprep.subr.mxu0 0.0
    %518 = vmatpush1.xpose.msra.mxu0 0.0
    %519 = vmatprep.subr.mxu0 0.0
    %520 = vmatpush1.xpose.msra.mxu0 0.0
    %521 = vmatprep.subr.mxu0 0.0
    %522 = vmatpush1.xpose.msra.mxu0 0.0
    %523 = vmatprep.subr.mxu0 0.0
    %524 = vmatpush1.xpose.msra.mxu0 0.0
    %525 = vmatprep.subr.mxu0 0.0
    %526 = vmatpush1.xpose.msra.mxu0 0.0
    %527 = vmatprep.subr.mxu0 0.0
    %528 = vmatpush1.xpose.msra.mxu0 0.0
    %529 = vmatprep.subr.mxu0 0.0
    %530 = vmatpush1.xpose.msra.mxu0 0.0
    %531 = vmatprep.subr.mxu0 0.0
    %532 = vmatpush1.xpose.msra.mxu0 0.0
    %533 = vmatprep.subr.mxu0 0.0
    %534 = vmatpush1.xpose.msra.mxu0 0.0
    %535 = vmatprep.subr.mxu0 0.0
    %536 = vmatpush1.xpose.msra.mxu0 0.0
    %537 = vmatprep.subr.mxu0 0.0
    %538 = vmatpush1.xpose.msra.mxu0 0.0
    %539 = vmatprep.subr.mxu0 0.0
    %540 = vmatpush1.xpose.msra.mxu0 0.0
    %541 = vmatprep.mubr.f32.mxu0 0.0
    %542 = vmatmul.mubr.f32.gmra.mrb[0].mxu0 %v473
    %v543 = vpop.f32.mrb[0].mxu0
    %v544 = vadd.f32 0.0, %v543
    %v545 = vpop.f32.mrb[0].mxu0
    %546 = vdwg.mxu0
    %547 = vrot.lane.b32.xlu0 %v161, 96
    %v548 = vpop.permute.xlu0 %547
    %v549 = vsel %vm168, %v161, 0
    %v551 = vsel %vm168, %v548, 0
    %553 = vmatprep.subr.mxu0 0.0
    %554 = vmatpush1.xpose.msra.mxu0 %v551
    %555 = vmatprep.subr.mxu0 0.0
    %556 = vmatpush1.xpose.msra.mxu0 0.0
    %557 = vmatprep.subr.mxu0 0.0
    %558 = vmatpush1.xpose.msra.mxu0 0.0
    %559 = vmatprep.subr.mxu0 0.0
    %560 = vmatpush1.xpose.msra.mxu0 0.0
    %561 = vmatprep.subr.mxu0 0.0
    %562 = vmatpush1.xpose.msra.mxu0 0.0
    %563 = vmatprep.subr.mxu0 0.0
    %564 = vmatpush1.xpose.msra.mxu0 0.0
    %565 = vmatprep.subr.mxu0 0.0
    %566 = vmatpush1.xpose.msra.mxu0 0.0
    %567 = vmatprep.subr.mxu0 0.0
    %568 = vmatpush1.xpose.msra.mxu0 0.0
    %569 = vmatprep.subr.mxu0 0.0
    %570 = vmatpush1.xpose.msra.mxu0 0.0
    %571 = vmatprep.subr.mxu0 0.0
    %572 = vmatpush1.xpose.msra.mxu0 0.0
    %573 = vmatprep.subr.mxu0 0.0
    %574 = vmatpush1.xpose.msra.mxu0 0.0
    %575 = vmatprep.subr.mxu0 0.0
    %576 = vmatpush1.xpose.msra.mxu0 0.0
    %577 = vmatprep.subr.mxu0 0.0
    %578 = vmatpush1.xpose.msra.mxu0 0.0
    %579 = vmatprep.subr.mxu0 0.0
    %580 = vmatpush1.xpose.msra.mxu0 0.0
    %581 = vmatprep.subr.mxu0 0.0
    %582 = vmatpush1.xpose.msra.mxu0 0.0
    %583 = vmatprep.subr.mxu0 0.0
    %584 = vmatpush1.xpose.msra.mxu0 0.0
    %585 = vmatprep.subr.mxu0 0.0
    %586 = vmatpush1.xpose.msra.mxu0 0.0
    %587 = vmatprep.subr.mxu0 0.0
    %588 = vmatpush1.xpose.msra.mxu0 0.0
    %589 = vmatprep.subr.mxu0 0.0
    %590 = vmatpush1.xpose.msra.mxu0 0.0
    %591 = vmatprep.subr.mxu0 0.0
    %592 = vmatpush1.xpose.msra.mxu0 0.0
    %593 = vmatprep.subr.mxu0 0.0
    %594 = vmatpush1.xpose.msra.mxu0 0.0
    %595 = vmatprep.subr.mxu0 0.0
    %596 = vmatpush1.xpose.msra.mxu0 0.0
    %597 = vmatprep.subr.mxu0 0.0
    %598 = vmatpush1.xpose.msra.mxu0 0.0
    %599 = vmatprep.subr.mxu0 0.0
    %600 = vmatpush1.xpose.msra.mxu0 0.0
    %601 = vmatprep.subr.mxu0 0.0
    %602 = vmatpush1.xpose.msra.mxu0 0.0
    %603 = vmatprep.subr.mxu0 0.0
    %604 = vmatpush1.xpose.msra.mxu0 0.0
    %605 = vmatprep.subr.mxu0 0.0
    %606 = vmatpush1.xpose.msra.mxu0 0.0
    %607 = vmatprep.subr.mxu0 0.0
    %608 = vmatpush1.xpose.msra.mxu0 0.0
    %609 = vmatprep.subr.mxu0 0.0
    %610 = vmatpush1.xpose.msra.mxu0 0.0
    %611 = vmatprep.subr.mxu0 0.0
    %612 = vmatpush1.xpose.msra.mxu0 0.0
    %613 = vmatprep.subr.mxu0 0.0
    %614 = vmatpush1.xpose.msra.mxu0 0.0
    %615 = vmatprep.subr.mxu0 0.0
    %616 = vmatpush1.xpose.msra.mxu0 0.0
    %617 = vmatprep.mubr.f32.mxu0 0.0
    %618 = vmatmul.mubr.f32.gmra.mrb[0].mxu0 %v549
    %v619 = vpop.f32.mrb[0].mxu0
    %v620 = vadd.f32 0.0, %v619
    %v621 = vpop.f32.mrb[0].mxu0
    %622 = vdwg.mxu0
    %623 = vrot.lane.b32.xlu0 %v163, 96
    %v624 = vpop.permute.xlu0 %623
    %v625 = vsel %vm168, %v163, 0
    %v627 = vsel %vm168, %v624, 0
    %629 = vmatprep.subr.mxu0 0.0
    %630 = vmatpush1.xpose.msra.mxu0 %v627
    %631 = vmatprep.subr.mxu0 0.0
    %632 = vmatpush1.xpose.msra.mxu0 0.0
    %633 = vmatprep.subr.mxu0 0.0
    %634 = vmatpush1.xpose.msra.mxu0 0.0
    %635 = vmatprep.subr.mxu0 0.0
    %636 = vmatpush1.xpose.msra.mxu0 0.0
    %637 = vmatprep.subr.mxu0 0.0
    %638 = vmatpush1.xpose.msra.mxu0 0.0
    %639 = vmatprep.subr.mxu0 0.0
    %640 = vmatpush1.xpose.msra.mxu0 0.0
    %641 = vmatprep.subr.mxu0 0.0
    %642 = vmatpush1.xpose.msra.mxu0 0.0
    %643 = vmatprep.subr.mxu0 0.0
    %644 = vmatpush1.xpose.msra.mxu0 0.0
    %645 = vmatprep.subr.mxu0 0.0
    %646 = vmatpush1.xpose.msra.mxu0 0.0
    %647 = vmatprep.subr.mxu0 0.0
    %648 = vmatpush1.xpose.msra.mxu0 0.0
    %649 = vmatprep.subr.mxu0 0.0
    %650 = vmatpush1.xpose.msra.mxu0 0.0
    %651 = vmatprep.subr.mxu0 0.0
    %652 = vmatpush1.xpose.msra.mxu0 0.0
    %653 = vmatprep.subr.mxu0 0.0
    %654 = vmatpush1.xpose.msra.mxu0 0.0
    %655 = vmatprep.subr.mxu0 0.0
    %656 = vmatpush1.xpose.msra.mxu0 0.0
    %657 = vmatprep.subr.mxu0 0.0
    %658 = vmatpush1.xpose.msra.mxu0 0.0
    %659 = vmatprep.subr.mxu0 0.0
    %660 = vmatpush1.xpose.msra.mxu0 0.0
    %661 = vmatprep.subr.mxu0 0.0
    %662 = vmatpush1.xpose.msra.mxu0 0.0
    %663 = vmatprep.subr.mxu0 0.0
    %664 = vmatpush1.xpose.msra.mxu0 0.0
    %665 = vmatprep.subr.mxu0 0.0
    %666 = vmatpush1.xpose.msra.mxu0 0.0
    %667 = vmatprep.subr.mxu0 0.0
    %668 = vmatpush1.xpose.msra.mxu0 0.0
    %669 = vmatprep.subr.mxu0 0.0
    %670 = vmatpush1.xpose.msra.mxu0 0.0
    %671 = vmatprep.subr.mxu0 0.0
    %672 = vmatpush1.xpose.msra.mxu0 0.0
    %673 = vmatprep.subr.mxu0 0.0
    %674 = vmatpush1.xpose.msra.mxu0 0.0
    %675 = vmatprep.subr.mxu0 0.0
    %676 = vmatpush1.xpose.msra.mxu0 0.0
    %677 = vmatprep.subr.mxu0 0.0
    %678 = vmatpush1.xpose.msra.mxu0 0.0
    %679 = vmatprep.subr.mxu0 0.0
    %680 = vmatpush1.xpose.msra.mxu0 0.0
    %681 = vmatprep.subr.mxu0 0.0
    %682 = vmatpush1.xpose.msra.mxu0 0.0
    %683 = vmatprep.subr.mxu0 0.0
    %684 = vmatpush1.xpose.msra.mxu0 0.0
    %685 = vmatprep.subr.mxu0 0.0
    %686 = vmatpush1.xpose.msra.mxu0 0.0
    %687 = vmatprep.subr.mxu0 0.0
    %688 = vmatpush1.xpose.msra.mxu0 0.0
    %689 = vmatprep.subr.mxu0 0.0
    %690 = vmatpush1.xpose.msra.mxu0 0.0
    %691 = vmatprep.subr.mxu0 0.0
    %692 = vmatpush1.xpose.msra.mxu0 0.0
    %693 = vmatprep.mubr.f32.mxu0 0.0
    %694 = vmatmul.mubr.f32.gmra.mrb[0].mxu0 %v625
    %v695 = vpop.f32.mrb[0].mxu0
    %v696 = vadd.f32 0.0, %v695
    %v697 = vpop.f32.mrb[0].mxu0
    %698 = vdwg.mxu0
    %699 = vrot.lane.b32.xlu0 %v165, 96
    %v700 = vpop.permute.xlu0 %699
    %v701 = vsel %vm168, %v165, 0
    %v703 = vsel %vm168, %v700, 0
    %705 = vmatprep.subr.mxu0 0.0
    %706 = vmatpush1.xpose.msra.mxu0 %v703
    %707 = vmatprep.subr.mxu0 0.0
    %708 = vmatpush1.xpose.msra.mxu0 0.0
    %709 = vmatprep.subr.mxu0 0.0
    %710 = vmatpush1.xpose.msra.mxu0 0.0
    %711 = vmatprep.subr.mxu0 0.0
    %712 = vmatpush1.xpose.msra.mxu0 0.0
    %713 = vmatprep.subr.mxu0 0.0
    %714 = vmatpush1.xpose.msra.mxu0 0.0
    %715 = vmatprep.subr.mxu0 0.0
    %716 = vmatpush1.xpose.msra.mxu0 0.0
    %717 = vmatprep.subr.mxu0 0.0
    %718 = vmatpush1.xpose.msra.mxu0 0.0
    %719 = vmatprep.subr.mxu0 0.0
    %720 = vmatpush1.xpose.msra.mxu0 0.0
    %721 = vmatprep.subr.mxu0 0.0
    %722 = vmatpush1.xpose.msra.mxu0 0.0
    %723 = vmatprep.subr.mxu0 0.0
    %724 = vmatpush1.xpose.msra.mxu0 0.0
    %725 = vmatprep.subr.mxu0 0.0
    %726 = vmatpush1.xpose.msra.mxu0 0.0
    %727 = vmatprep.subr.mxu0 0.0
    %728 = vmatpush1.xpose.msra.mxu0 0.0
    %729 = vmatprep.subr.mxu0 0.0
    %730 = vmatpush1.xpose.msra.mxu0 0.0
    %731 = vmatprep.subr.mxu0 0.0
    %732 = vmatpush1.xpose.msra.mxu0 0.0
    %733 = vmatprep.subr.mxu0 0.0
    %734 = vmatpush1.xpose.msra.mxu0 0.0
    %735 = vmatprep.subr.mxu0 0.0
    %736 = vmatpush1.xpose.msra.mxu0 0.0
    %737 = vmatprep.subr.mxu0 0.0
    %738 = vmatpush1.xpose.msra.mxu0 0.0
    %739 = vmatprep.subr.mxu0 0.0
    %740 = vmatpush1.xpose.msra.mxu0 0.0
    %741 = vmatprep.subr.mxu0 0.0
    %742 = vmatpush1.xpose.msra.mxu0 0.0
    %743 = vmatprep.subr.mxu0 0.0
    %744 = vmatpush1.xpose.msra.mxu0 0.0
    %745 = vmatprep.subr.mxu0 0.0
    %746 = vmatpush1.xpose.msra.mxu0 0.0
    %747 = vmatprep.subr.mxu0 0.0
    %748 = vmatpush1.xpose.msra.mxu0 0.0
    %749 = vmatprep.subr.mxu0 0.0
    %750 = vmatpush1.xpose.msra.mxu0 0.0
    %751 = vmatprep.subr.mxu0 0.0
    %752 = vmatpush1.xpose.msra.mxu0 0.0
    %753 = vmatprep.subr.mxu0 0.0
    %754 = vmatpush1.xpose.msra.mxu0 0.0
    %755 = vmatprep.subr.mxu0 0.0
    %756 = vmatpush1.xpose.msra.mxu0 0.0
    %757 = vmatprep.subr.mxu0 0.0
    %758 = vmatpush1.xpose.msra.mxu0 0.0
    %759 = vmatprep.subr.mxu0 0.0
    %760 = vmatpush1.xpose.msra.mxu0 0.0
    %761 = vmatprep.subr.mxu0 0.0
    %762 = vmatpush1.xpose.msra.mxu0 0.0
    %763 = vmatprep.subr.mxu0 0.0
    %764 = vmatpush1.xpose.msra.mxu0 0.0
    %765 = vmatprep.subr.mxu0 0.0
    %766 = vmatpush1.xpose.msra.mxu0 0.0
    %767 = vmatprep.subr.mxu0 0.0
    %768 = vmatpush1.xpose.msra.mxu0 0.0
    %769 = vmatprep.mubr.f32.mxu0 0.0
    %770 = vmatmul.mubr.f32.gmra.mrb[0].mxu0 %v701
    %v771 = vpop.f32.mrb[0].mxu0
    %v772 = vadd.f32 0.0, %v771
    %v773 = vpop.f32.mrb[0].mxu0
    %774 = vdwg.mxu0
    %v775 = vsel %vm168, %v240, -inf
    %776 = vmax.xlane.f32.xlu0 %v775
    %v777 = vpop.xlane.xlu0 %776
    %v778 = vsel %vm168, %v316, -inf
    %779 = vmax.xlane.f32.xlu0 %v778
    %v780 = vpop.xlane.xlu0 %779
    %v781 = vsel %vm168, %v392, -inf
    %782 = vmax.xlane.f32.xlu0 %v781
    %v783 = vpop.xlane.xlu0 %782
    %v784 = vsel %vm168, %v468, -inf
    %785 = vmax.xlane.f32.xlu0 %v784
    %v786 = vpop.xlane.xlu0 %785
    %v787 = vsel %vm168, %v544, -inf
    %788 = vmax.xlane.f32.xlu0 %v787
    %v789 = vpop.xlane.xlu0 %788
    %v790 = vsel %vm168, %v620, -inf
    %791 = vmax.xlane.f32.xlu0 %v790
    %v792 = vpop.xlane.xlu0 %791
    %v793 = vsel %vm168, %v696, -inf
    %794 = vmax.xlane.f32.xlu0 %v793
    %v795 = vpop.xlane.xlu0 %794
    %v796 = vsel %vm168, %v772, -inf
    %797 = vmax.xlane.f32.xlu0 %v796
    %v798 = vpop.xlane.xlu0 %797
    %v799 = vsub.f32 %v240, %v777
    %v800 = vsub.f32 %v316, %v780
    %v801 = vsub.f32 %v392, %v783
    %v802 = vsub.f32 %v468, %v786
    %v803 = vsub.f32 %v544, %v789
    %v804 = vsub.f32 %v620, %v792
    %v805 = vsub.f32 %v696, %v795
    %v806 = vsub.f32 %v772, %v798
    %v807 = vmul.f32 %v799, 1.442695
    %v808 = vpow.pop %v807
    %v809 = vmul.f32 %v800, 1.442695
    %v810 = vpow.pop %v809
    %v811 = vmul.f32 %v801, 1.442695
    %v812 = vpow.pop %v811
    %v813 = vmul.f32 %v802, 1.442695
    %v814 = vpow.pop %v813
    %v815 = vmul.f32 %v803, 1.442695
    %v816 = vpow.pop %v815
    %v817 = vmul.f32 %v804, 1.442695
    %v818 = vpow.pop %v817
    %v819 = vmul.f32 %v805, 1.442695
    %v820 = vpow.pop %v819
    %v821 = vmul.f32 %v806, 1.442695
    %v822 = vpow.pop %v821
    %v823 = vsel %vm168, %v808, 0.0
    %824 = vadd.xlane.f32.xlu0 %v823
    %v825 = vpop.xlane.xlu0 %824
    %v826 = vsel %vm168, %v810, 0.0
    %827 = vadd.xlane.f32.xlu0 %v826
    %v828 = vpop.xlane.xlu0 %827
    %v829 = vsel %vm168, %v812, 0.0
    %830 = vadd.xlane.f32.xlu0 %v829
    %v831 = vpop.xlane.xlu0 %830
    %v832 = vsel %vm168, %v814, 0.0
    %833 = vadd.xlane.f32.xlu0 %v832
    %v834 = vpop.xlane.xlu0 %833
    %v835 = vsel %vm168, %v816, 0.0
    %836 = vadd.xlane.f32.xlu0 %v835
    %v837 = vpop.xlane.xlu0 %836
    %v838 = vsel %vm168, %v818, 0.0
    %839 = vadd.xlane.f32.xlu0 %v838
    %v840 = vpop.xlane.xlu0 %839
    %v841 = vsel %vm168, %v820, 0.0
    %842 = vadd.xlane.f32.xlu0 %v841
    %v843 = vpop.xlane.xlu0 %842
    %v844 = vsel %vm168, %v822, 0.0
    %845 = vadd.xlane.f32.xlu0 %v844
    %v846 = vpop.xlane.xlu0 %845
    %v847 = vrcp.pop %v825
    %v848 = vrcp.pop %v828
    %v849 = vrcp.pop %v831
    %v850 = vrcp.pop %v834
    %v851 = vrcp.pop %v837
    %v852 = vrcp.pop %v840
    %v853 = vrcp.pop %v843
    %v854 = vrcp.pop %v846
    %v855 = vmul.f32 %v808, %v847
    %v856 = vmul.f32 %v810, %v848
    %v857 = vmul.f32 %v812, %v849
    %v858 = vmul.f32 %v814, %v850
    %v859 = vmul.f32 %v816, %v851
    %v860 = vmul.f32 %v818, %v852
    %v861 = vmul.f32 %v820, %v853
    %v862 = vmul.f32 %v822, %v854
    %863 = vrot.lane.b32.xlu0 %v144, 64
    %v864 = vpop.permute.xlu0 %863
    %v867 = vsel %vm168, %v855, 0
    %869 = vmatprep.subr.mxu0 0.0
    %870 = vmatpush1.msra.mxu0 %v864
    %871 = vmatprep.subr.mxu0 0.0
    %872 = vmatpush1.msra.mxu0 0.0
    %873 = vmatprep.subr.mxu0 0.0
    %874 = vmatpush1.msra.mxu0 0.0
    %875 = vmatprep.subr.mxu0 0.0
    %876 = vmatpush1.msra.mxu0 0.0
    %877 = vmatprep.subr.mxu0 0.0
    %878 = vmatpush1.msra.mxu0 0.0
    %879 = vmatprep.subr.mxu0 0.0
    %880 = vmatpush1.msra.mxu0 0.0
    %881 = vmatprep.subr.mxu0 0.0
    %882 = vmatpush1.msra.mxu0 0.0
    %883 = vmatprep.subr.mxu0 0.0
    %884 = vmatpush1.msra.mxu0 0.0
    %885 = vmatprep.subr.mxu0 0.0
    %886 = vmatpush1.msra.mxu0 0.0
    %887 = vmatprep.subr.mxu0 0.0
    %888 = vmatpush1.msra.mxu0 0.0
    %889 = vmatprep.subr.mxu0 0.0
    %890 = vmatpush1.msra.mxu0 0.0
    %891 = vmatprep.subr.mxu0 0.0
    %892 = vmatpush1.msra.mxu0 0.0
    %893 = vmatprep.subr.mxu0 0.0
    %894 = vmatpush1.msra.mxu0 0.0
    %895 = vmatprep.subr.mxu0 0.0
    %896 = vmatpush1.msra.mxu0 0.0
    %897 = vmatprep.subr.mxu0 0.0
    %898 = vmatpush1.msra.mxu0 0.0
    %899 = vmatprep.subr.mxu0 0.0
    %900 = vmatpush1.msra.mxu0 0.0
    %901 = vmatprep.subr.mxu0 0.0
    %902 = vmatpush1.msra.mxu0 0.0
    %903 = vmatprep.subr.mxu0 0.0
    %904 = vmatpush1.msra.mxu0 0.0
    %905 = vmatprep.subr.mxu0 0.0
    %906 = vmatpush1.msra.mxu0 0.0
    %907 = vmatprep.subr.mxu0 0.0
    %908 = vmatpush1.msra.mxu0 0.0
    %909 = vmatprep.subr.mxu0 0.0
    %910 = vmatpush1.msra.mxu0 0.0
    %911 = vmatprep.subr.mxu0 0.0
    %912 = vmatpush1.msra.mxu0 0.0
    %913 = vmatprep.subr.mxu0 0.0
    %914 = vmatpush1.msra.mxu0 0.0
    %915 = vmatprep.subr.mxu0 0.0
    %916 = vmatpush1.msra.mxu0 0.0
    %917 = vmatprep.subr.mxu0 0.0
    %918 = vmatpush1.msra.mxu0 0.0
    %919 = vmatprep.subr.mxu0 0.0
    %920 = vmatpush1.msra.mxu0 0.0
    %921 = vmatprep.subr.mxu0 0.0
    %922 = vmatpush1.msra.mxu0 0.0
    %923 = vmatprep.subr.mxu0 0.0
    %924 = vmatpush1.msra.mxu0 0.0
    %925 = vmatprep.subr.mxu0 0.0
    %926 = vmatpush1.msra.mxu0 0.0
    %927 = vmatprep.subr.mxu0 0.0
    %928 = vmatpush1.msra.mxu0 0.0
    %929 = vmatprep.subr.mxu0 0.0
    %930 = vmatpush1.msra.mxu0 0.0
    %931 = vmatprep.subr.mxu0 0.0
    %932 = vmatpush1.msra.mxu0 0.0
    %933 = vmatprep.mubr.f32.mxu0 0.0
    %934 = vmatmul.mubr.f32.gmra.mrb[0].mxu0 %v867
    %v935 = vpop.f32.mrb[0].mxu0
    %v936 = vadd.f32 0.0, %v935
    %v937 = vpop.f32.mrb[0].mxu0
    %938 = vdwg.mxu0
    %939 = vrot.lane.b32.xlu0 %v149, 64
    %v940 = vpop.permute.xlu0 %939
    %v943 = vsel %vm168, %v856, 0
    %945 = vmatprep.subr.mxu0 0.0
    %946 = vmatpush1.msra.mxu0 %v940
    %947 = vmatprep.subr.mxu0 0.0
    %948 = vmatpush1.msra.mxu0 0.0
    %949 = vmatprep.subr.mxu0 0.0
    %950 = vmatpush1.msra.mxu0 0.0
    %951 = vmatprep.subr.mxu0 0.0
    %952 = vmatpush1.msra.mxu0 0.0
    %953 = vmatprep.subr.mxu0 0.0
    %954 = vmatpush1.msra.mxu0 0.0
    %955 = vmatprep.subr.mxu0 0.0
    %956 = vmatpush1.msra.mxu0 0.0
    %957 = vmatprep.subr.mxu0 0.0
    %958 = vmatpush1.msra.mxu0 0.0
    %959 = vmatprep.subr.mxu0 0.0
    %960 = vmatpush1.msra.mxu0 0.0
    %961 = vmatprep.subr.mxu0 0.0
    %962 = vmatpush1.msra.mxu0 0.0
    %963 = vmatprep.subr.mxu0 0.0
    %964 = vmatpush1.msra.mxu0 0.0
    %965 = vmatprep.subr.mxu0 0.0
    %966 = vmatpush1.msra.mxu0 0.0
    %967 = vmatprep.subr.mxu0 0.0
    %968 = vmatpush1.msra.mxu0 0.0
    %969 = vmatprep.subr.mxu0 0.0
    %970 = vmatpush1.msra.mxu0 0.0
    %971 = vmatprep.subr.mxu0 0.0
    %972 = vmatpush1.msra.mxu0 0.0
    %973 = vmatprep.subr.mxu0 0.0
    %974 = vmatpush1.msra.mxu0 0.0
    %975 = vmatprep.subr.mxu0 0.0
    %976 = vmatpush1.msra.mxu0 0.0
    %977 = vmatprep.subr.mxu0 0.0
    %978 = vmatpush1.msra.mxu0 0.0
    %979 = vmatprep.subr.mxu0 0.0
    %980 = vmatpush1.msra.mxu0 0.0
    %981 = vmatprep.subr.mxu0 0.0
    %982 = vmatpush1.msra.mxu0 0.0
    %983 = vmatprep.subr.mxu0 0.0
    %984 = vmatpush1.msra.mxu0 0.0
    %985 = vmatprep.subr.mxu0 0.0
    %986 = vmatpush1.msra.mxu0 0.0
    %987 = vmatprep.subr.mxu0 0.0
    %988 = vmatpush1.msra.mxu0 0.0
    %989 = vmatprep.subr.mxu0 0.0
    %990 = vmatpush1.msra.mxu0 0.0
    %991 = vmatprep.subr.mxu0 0.0
    %992 = vmatpush1.msra.mxu0 0.0
    %993 = vmatprep.subr.mxu0 0.0
    %994 = vmatpush1.msra.mxu0 0.0
    %995 = vmatprep.subr.mxu0 0.0
    %996 = vmatpush1.msra.mxu0 0.0
    %997 = vmatprep.subr.mxu0 0.0
    %998 = vmatpush1.msra.mxu0 0.0
    %999 = vmatprep.subr.mxu0 0.0
    %1000 = vmatpush1.msra.mxu0 0.0
    %1001 = vmatprep.subr.mxu0 0.0
    %1002 = vmatpush1.msra.mxu0 0.0
    %1003 = vmatprep.subr.mxu0 0.0
    %1004 = vmatpush1.msra.mxu0 0.0
    %1005 = vmatprep.subr.mxu0 0.0
    %1006 = vmatpush1.msra.mxu0 0.0
    %1007 = vmatprep.subr.mxu0 0.0
    %1008 = vmatpush1.msra.mxu0 0.0
    %1009 = vmatprep.mubr.f32.mxu0 0.0
    %1010 = vmatmul.mubr.f32.gmra.mrb[0].mxu0 %v943
    %v1011 = vpop.f32.mrb[0].mxu0
    %v1012 = vadd.f32 0.0, %v1011
    %v1013 = vpop.f32.mrb[0].mxu0
    %1014 = vdwg.mxu0
    %1015 = vrot.lane.b32.xlu0 %v155, 64
    %v1016 = vpop.permute.xlu0 %1015
    %v1019 = vsel %vm168, %v857, 0
    %1021 = vmatprep.subr.mxu0 0.0
    %1022 = vmatpush1.msra.mxu0 %v1016
    %1023 = vmatprep.subr.mxu0 0.0
    %1024 = vmatpush1.msra.mxu0 0.0
    %1025 = vmatprep.subr.mxu0 0.0
    %1026 = vmatpush1.msra.mxu0 0.0
    %1027 = vmatprep.subr.mxu0 0.0
    %1028 = vmatpush1.msra.mxu0 0.0
    %1029 = vmatprep.subr.mxu0 0.0
    %1030 = vmatpush1.msra.mxu0 0.0
    %1031 = vmatprep.subr.mxu0 0.0
    %1032 = vmatpush1.msra.mxu0 0.0
    %1033 = vmatprep.subr.mxu0 0.0
    %1034 = vmatpush1.msra.mxu0 0.0
    %1035 = vmatprep.subr.mxu0 0.0
    %1036 = vmatpush1.msra.mxu0 0.0
    %1037 = vmatprep.subr.mxu0 0.0
    %1038 = vmatpush1.msra.mxu0 0.0
    %1039 = vmatprep.subr.mxu0 0.0
    %1040 = vmatpush1.msra.mxu0 0.0
    %1041 = vmatprep.subr.mxu0 0.0
    %1042 = vmatpush1.msra.mxu0 0.0
    %1043 = vmatprep.subr.mxu0 0.0
    %1044 = vmatpush1.msra.mxu0 0.0
    %1045 = vmatprep.subr.mxu0 0.0
    %1046 = vmatpush1.msra.mxu0 0.0
    %1047 = vmatprep.subr.mxu0 0.0
    %1048 = vmatpush1.msra.mxu0 0.0
    %1049 = vmatprep.subr.mxu0 0.0
    %1050 = vmatpush1.msra.mxu0 0.0
    %1051 = vmatprep.subr.mxu0 0.0
    %1052 = vmatpush1.msra.mxu0 0.0
    %1053 = vmatprep.subr.mxu0 0.0
    %1054 = vmatpush1.msra.mxu0 0.0
    %1055 = vmatprep.subr.mxu0 0.0
    %1056 = vmatpush1.msra.mxu0 0.0
    %1057 = vmatprep.subr.mxu0 0.0
    %1058 = vmatpush1.msra.mxu0 0.0
    %1059 = vmatprep.subr.mxu0 0.0
    %1060 = vmatpush1.msra.mxu0 0.0
    %1061 = vmatprep.subr.mxu0 0.0
    %1062 = vmatpush1.msra.mxu0 0.0
    %1063 = vmatprep.subr.mxu0 0.0
    %1064 = vmatpush1.msra.mxu0 0.0
    %1065 = vmatprep.subr.mxu0 0.0
    %1066 = vmatpush1.msra.mxu0 0.0
    %1067 = vmatprep.subr.mxu0 0.0
    %1068 = vmatpush1.msra.mxu0 0.0
    %1069 = vmatprep.subr.mxu0 0.0
    %1070 = vmatpush1.msra.mxu0 0.0
    %1071 = vmatprep.subr.mxu0 0.0
    %1072 = vmatpush1.msra.mxu0 0.0
    %1073 = vmatprep.subr.mxu0 0.0
    %1074 = vmatpush1.msra.mxu0 0.0
    %1075 = vmatprep.subr.mxu0 0.0
    %1076 = vmatpush1.msra.mxu0 0.0
    %1077 = vmatprep.subr.mxu0 0.0
    %1078 = vmatpush1.msra.mxu0 0.0
    %1079 = vmatprep.subr.mxu0 0.0
    %1080 = vmatpush1.msra.mxu0 0.0
    %1081 = vmatprep.subr.mxu0 0.0
    %1082 = vmatpush1.msra.mxu0 0.0
    %1083 = vmatprep.subr.mxu0 0.0
    %1084 = vmatpush1.msra.mxu0 0.0
    %1085 = vmatprep.mubr.f32.mxu0 0.0
    %1086 = vmatmul.mubr.f32.gmra.mrb[0].mxu0 %v1019
    %v1087 = vpop.f32.mrb[0].mxu0
    %v1088 = vadd.f32 0.0, %v1087
    %v1089 = vpop.f32.mrb[0].mxu0
    %1090 = vdwg.mxu0
    %1091 = vrot.lane.b32.xlu0 %v157, 64
    %v1092 = vpop.permute.xlu0 %1091
    %v1095 = vsel %vm168, %v858, 0
    %1097 = vmatprep.subr.mxu0 0.0
    %1098 = vmatpush1.msra.mxu0 %v1092
    %1099 = vmatprep.subr.mxu0 0.0
    %1100 = vmatpush1.msra.mxu0 0.0
    %1101 = vmatprep.subr.mxu0 0.0
    %1102 = vmatpush1.msra.mxu0 0.0
    %1103 = vmatprep.subr.mxu0 0.0
    %1104 = vmatpush1.msra.mxu0 0.0
    %1105 = vmatprep.subr.mxu0 0.0
    %1106 = vmatpush1.msra.mxu0 0.0
    %1107 = vmatprep.subr.mxu0 0.0
    %1108 = vmatpush1.msra.mxu0 0.0
    %1109 = vmatprep.subr.mxu0 0.0
    %1110 = vmatpush1.msra.mxu0 0.0
    %1111 = vmatprep.subr.mxu0 0.0
    %1112 = vmatpush1.msra.mxu0 0.0
    %1113 = vmatprep.subr.mxu0 0.0
    %1114 = vmatpush1.msra.mxu0 0.0
    %1115 = vmatprep.subr.mxu0 0.0
    %1116 = vmatpush1.msra.mxu0 0.0
    %1117 = vmatprep.subr.mxu0 0.0
    %1118 = vmatpush1.msra.mxu0 0.0
    %1119 = vmatprep.subr.mxu0 0.0
    %1120 = vmatpush1.msra.mxu0 0.0
    %1121 = vmatprep.subr.mxu0 0.0
    %1122 = vmatpush1.msra.mxu0 0.0
    %1123 = vmatprep.subr.mxu0 0.0
    %1124 = vmatpush1.msra.mxu0 0.0
    %1125 = vmatprep.subr.mxu0 0.0
    %1126 = vmatpush1.msra.mxu0 0.0
    %1127 = vmatprep.subr.mxu0 0.0
    %1128 = vmatpush1.msra.mxu0 0.0
    %1129 = vmatprep.subr.mxu0 0.0
    %1130 = vmatpush1.msra.mxu0 0.0
    %1131 = vmatprep.subr.mxu0 0.0
    %1132 = vmatpush1.msra.mxu0 0.0
    %1133 = vmatprep.subr.mxu0 0.0
    %1134 = vmatpush1.msra.mxu0 0.0
    %1135 = vmatprep.subr.mxu0 0.0
    %1136 = vmatpush1.msra.mxu0 0.0
    %1137 = vmatprep.subr.mxu0 0.0
    %1138 = vmatpush1.msra.mxu0 0.0
    %1139 = vmatprep.subr.mxu0 0.0
    %1140 = vmatpush1.msra.mxu0 0.0
    %1141 = vmatprep.subr.mxu0 0.0
    %1142 = vmatpush1.msra.mxu0 0.0
    %1143 = vmatprep.subr.mxu0 0.0
    %1144 = vmatpush1.msra.mxu0 0.0
    %1145 = vmatprep.subr.mxu0 0.0
    %1146 = vmatpush1.msra.mxu0 0.0
    %1147 = vmatprep.subr.mxu0 0.0
    %1148 = vmatpush1.msra.mxu0 0.0
    %1149 = vmatprep.subr.mxu0 0.0
    %1150 = vmatpush1.msra.mxu0 0.0
    %1151 = vmatprep.subr.mxu0 0.0
    %1152 = vmatpush1.msra.mxu0 0.0
    %1153 = vmatprep.subr.mxu0 0.0
    %1154 = vmatpush1.msra.mxu0 0.0
    %1155 = vmatprep.subr.mxu0 0.0
    %1156 = vmatpush1.msra.mxu0 0.0
    %1157 = vmatprep.subr.mxu0 0.0
    %1158 = vmatpush1.msra.mxu0 0.0
    %1159 = vmatprep.subr.mxu0 0.0
    %1160 = vmatpush1.msra.mxu0 0.0
    %1161 = vmatprep.mubr.f32.mxu0 0.0
    %1162 = vmatmul.mubr.f32.gmra.mrb[0].mxu0 %v1095
    %v1163 = vpop.f32.mrb[0].mxu0
    %v1164 = vadd.f32 0.0, %v1163
    %v1165 = vpop.f32.mrb[0].mxu0
    %1166 = vdwg.mxu0
    %1167 = vrot.lane.b32.xlu0 %v159, 64
    %v1168 = vpop.permute.xlu0 %1167
    %v1171 = vsel %vm168, %v859, 0
    %1173 = vmatprep.subr.mxu0 0.0
    %1174 = vmatpush1.msra.mxu0 %v1168
    %1175 = vmatprep.subr.mxu0 0.0
    %1176 = vmatpush1.msra.mxu0 0.0
    %1177 = vmatprep.subr.mxu0 0.0
    %1178 = vmatpush1.msra.mxu0 0.0
    %1179 = vmatprep.subr.mxu0 0.0
    %1180 = vmatpush1.msra.mxu0 0.0
    %1181 = vmatprep.subr.mxu0 0.0
    %1182 = vmatpush1.msra.mxu0 0.0
    %1183 = vmatprep.subr.mxu0 0.0
    %1184 = vmatpush1.msra.mxu0 0.0
    %1185 = vmatprep.subr.mxu0 0.0
    %1186 = vmatpush1.msra.mxu0 0.0
    %1187 = vmatprep.subr.mxu0 0.0
    %1188 = vmatpush1.msra.mxu0 0.0
    %1189 = vmatprep.subr.mxu0 0.0
    %1190 = vmatpush1.msra.mxu0 0.0
    %1191 = vmatprep.subr.mxu0 0.0
    %1192 = vmatpush1.msra.mxu0 0.0
    %1193 = vmatprep.subr.mxu0 0.0
    %1194 = vmatpush1.msra.mxu0 0.0
    %1195 = vmatprep.subr.mxu0 0.0
    %1196 = vmatpush1.msra.mxu0 0.0
    %1197 = vmatprep.subr.mxu0 0.0
    %1198 = vmatpush1.msra.mxu0 0.0
    %1199 = vmatprep.subr.mxu0 0.0
    %1200 = vmatpush1.msra.mxu0 0.0
    %1201 = vmatprep.subr.mxu0 0.0
    %1202 = vmatpush1.msra.mxu0 0.0
    %1203 = vmatprep.subr.mxu0 0.0
    %1204 = vmatpush1.msra.mxu0 0.0
    %1205 = vmatprep.subr.mxu0 0.0
    %1206 = vmatpush1.msra.mxu0 0.0
    %1207 = vmatprep.subr.mxu0 0.0
    %1208 = vmatpush1.msra.mxu0 0.0
    %1209 = vmatprep.subr.mxu0 0.0
    %1210 = vmatpush1.msra.mxu0 0.0
    %1211 = vmatprep.subr.mxu0 0.0
    %1212 = vmatpush1.msra.mxu0 0.0
    %1213 = vmatprep.subr.mxu0 0.0
    %1214 = vmatpush1.msra.mxu0 0.0
    %1215 = vmatprep.subr.mxu0 0.0
    %1216 = vmatpush1.msra.mxu0 0.0
    %1217 = vmatprep.subr.mxu0 0.0
    %1218 = vmatpush1.msra.mxu0 0.0
    %1219 = vmatprep.subr.mxu0 0.0
    %1220 = vmatpush1.msra.mxu0 0.0
    %1221 = vmatprep.subr.mxu0 0.0
    %1222 = vmatpush1.msra.mxu0 0.0
    %1223 = vmatprep.subr.mxu0 0.0
    %1224 = vmatpush1.msra.mxu0 0.0
    %1225 = vmatprep.subr.mxu0 0.0
    %1226 = vmatpush1.msra.mxu0 0.0
    %1227 = vmatprep.subr.mxu0 0.0
    %1228 = vmatpush1.msra.mxu0 0.0
    %1229 = vmatprep.subr.mxu0 0.0
    %1230 = vmatpush1.msra.mxu0 0.0
    %1231 = vmatprep.subr.mxu0 0.0
    %1232 = vmatpush1.msra.mxu0 0.0
    %1233 = vmatprep.subr.mxu0 0.0
    %1234 = vmatpush1.msra.mxu0 0.0
    %1235 = vmatprep.subr.mxu0 0.0
    %1236 = vmatpush1.msra.mxu0 0.0
    %1237 = vmatprep.mubr.f32.mxu0 0.0
    %1238 = vmatmul.mubr.f32.gmra.mrb[0].mxu0 %v1171
    %v1239 = vpop.f32.mrb[0].mxu0
    %v1240 = vadd.f32 0.0, %v1239
    %v1241 = vpop.f32.mrb[0].mxu0
    %1242 = vdwg.mxu0
    %1243 = vrot.lane.b32.xlu0 %v161, 64
    %v1244 = vpop.permute.xlu0 %1243
    %v1247 = vsel %vm168, %v860, 0
    %1249 = vmatprep.subr.mxu0 0.0
    %1250 = vmatpush1.msra.mxu0 %v1244
    %1251 = vmatprep.subr.mxu0 0.0
    %1252 = vmatpush1.msra.mxu0 0.0
    %1253 = vmatprep.subr.mxu0 0.0
    %1254 = vmatpush1.msra.mxu0 0.0
    %1255 = vmatprep.subr.mxu0 0.0
    %1256 = vmatpush1.msra.mxu0 0.0
    %1257 = vmatprep.subr.mxu0 0.0
    %1258 = vmatpush1.msra.mxu0 0.0
    %1259 = vmatprep.subr.mxu0 0.0
    %1260 = vmatpush1.msra.mxu0 0.0
    %1261 = vmatprep.subr.mxu0 0.0
    %1262 = vmatpush1.msra.mxu0 0.0
    %1263 = vmatprep.subr.mxu0 0.0
    %1264 = vmatpush1.msra.mxu0 0.0
    %1265 = vmatprep.subr.mxu0 0.0
    %1266 = vmatpush1.msra.mxu0 0.0
    %1267 = vmatprep.subr.mxu0 0.0
    %1268 = vmatpush1.msra.mxu0 0.0
    %1269 = vmatprep.subr.mxu0 0.0
    %1270 = vmatpush1.msra.mxu0 0.0
    %1271 = vmatprep.subr.mxu0 0.0
    %1272 = vmatpush1.msra.mxu0 0.0
    %1273 = vmatprep.subr.mxu0 0.0
    %1274 = vmatpush1.msra.mxu0 0.0
    %1275 = vmatprep.subr.mxu0 0.0
    %1276 = vmatpush1.msra.mxu0 0.0
    %1277 = vmatprep.subr.mxu0 0.0
    %1278 = vmatpush1.msra.mxu0 0.0
    %1279 = vmatprep.subr.mxu0 0.0
    %1280 = vmatpush1.msra.mxu0 0.0
    %1281 = vmatprep.subr.mxu0 0.0
    %1282 = vmatpush1.msra.mxu0 0.0
    %1283 = vmatprep.subr.mxu0 0.0
    %1284 = vmatpush1.msra.mxu0 0.0
    %1285 = vmatprep.subr.mxu0 0.0
    %1286 = vmatpush1.msra.mxu0 0.0
    %1287 = vmatprep.subr.mxu0 0.0
    %1288 = vmatpush1.msra.mxu0 0.0
    %1289 = vmatprep.subr.mxu0 0.0
    %1290 = vmatpush1.msra.mxu0 0.0
    %1291 = vmatprep.subr.mxu0 0.0
    %1292 = vmatpush1.msra.mxu0 0.0
    %1293 = vmatprep.subr.mxu0 0.0
    %1294 = vmatpush1.msra.mxu0 0.0
    %1295 = vmatprep.subr.mxu0 0.0
    %1296 = vmatpush1.msra.mxu0 0.0
    %1297 = vmatprep.subr.mxu0 0.0
    %1298 = vmatpush1.msra.mxu0 0.0
    %1299 = vmatprep.subr.mxu0 0.0
    %1300 = vmatpush1.msra.mxu0 0.0
    %1301 = vmatprep.subr.mxu0 0.0
    %1302 = vmatpush1.msra.mxu0 0.0
    %1303 = vmatprep.subr.mxu0 0.0
    %1304 = vmatpush1.msra.mxu0 0.0
    %1305 = vmatprep.subr.mxu0 0.0
    %1306 = vmatpush1.msra.mxu0 0.0
    %1307 = vmatprep.subr.mxu0 0.0
    %1308 = vmatpush1.msra.mxu0 0.0
    %1309 = vmatprep.subr.mxu0 0.0
    %1310 = vmatpush1.msra.mxu0 0.0
    %1311 = vmatprep.subr.mxu0 0.0
    %1312 = vmatpush1.msra.mxu0 0.0
    %1313 = vmatprep.mubr.f32.mxu0 0.0
    %1314 = vmatmul.mubr.f32.gmra.mrb[0].mxu0 %v1247
    %v1315 = vpop.f32.mrb[0].mxu0
    %v1316 = vadd.f32 0.0, %v1315
    %v1317 = vpop.f32.mrb[0].mxu0
    %1318 = vdwg.mxu0
    %1319 = vrot.lane.b32.xlu0 %v163, 64
    %v1320 = vpop.permute.xlu0 %1319
    %v1323 = vsel %vm168, %v861, 0
    %1325 = vmatprep.subr.mxu0 0.0
    %1326 = vmatpush1.msra.mxu0 %v1320
    %1327 = vmatprep.subr.mxu0 0.0
    %1328 = vmatpush1.msra.mxu0 0.0
    %1329 = vmatprep.subr.mxu0 0.0
    %1330 = vmatpush1.msra.mxu0 0.0
    %1331 = vmatprep.subr.mxu0 0.0
    %1332 = vmatpush1.msra.mxu0 0.0
    %1333 = vmatprep.subr.mxu0 0.0
    %1334 = vmatpush1.msra.mxu0 0.0
    %1335 = vmatprep.subr.mxu0 0.0
    %1336 = vmatpush1.msra.mxu0 0.0
    %1337 = vmatprep.subr.mxu0 0.0
    %1338 = vmatpush1.msra.mxu0 0.0
    %1339 = vmatprep.subr.mxu0 0.0
    %1340 = vmatpush1.msra.mxu0 0.0
    %1341 = vmatprep.subr.mxu0 0.0
    %1342 = vmatpush1.msra.mxu0 0.0
    %1343 = vmatprep.subr.mxu0 0.0
    %1344 = vmatpush1.msra.mxu0 0.0
    %1345 = vmatprep.subr.mxu0 0.0
    %1346 = vmatpush1.msra.mxu0 0.0
    %1347 = vmatprep.subr.mxu0 0.0
    %1348 = vmatpush1.msra.mxu0 0.0
    %1349 = vmatprep.subr.mxu0 0.0
    %1350 = vmatpush1.msra.mxu0 0.0
    %1351 = vmatprep.subr.mxu0 0.0
    %1352 = vmatpush1.msra.mxu0 0.0
    %1353 = vmatprep.subr.mxu0 0.0
    %1354 = vmatpush1.msra.mxu0 0.0
    %1355 = vmatprep.subr.mxu0 0.0
    %1356 = vmatpush1.msra.mxu0 0.0
    %1357 = vmatprep.subr.mxu0 0.0
    %1358 = vmatpush1.msra.mxu0 0.0
    %1359 = vmatprep.subr.mxu0 0.0
    %1360 = vmatpush1.msra.mxu0 0.0
    %1361 = vmatprep.subr.mxu0 0.0
    %1362 = vmatpush1.msra.mxu0 0.0
    %1363 = vmatprep.subr.mxu0 0.0
    %1364 = vmatpush1.msra.mxu0 0.0
    %1365 = vmatprep.subr.mxu0 0.0
    %1366 = vmatpush1.msra.mxu0 0.0
    %1367 = vmatprep.subr.mxu0 0.0
    %1368 = vmatpush1.msra.mxu0 0.0
    %1369 = vmatprep.subr.mxu0 0.0
    %1370 = vmatpush1.msra.mxu0 0.0
    %1371 = vmatprep.subr.mxu0 0.0
    %1372 = vmatpush1.msra.mxu0 0.0
    %1373 = vmatprep.subr.mxu0 0.0
    %1374 = vmatpush1.msra.mxu0 0.0
    %1375 = vmatprep.subr.mxu0 0.0
    %1376 = vmatpush1.msra.mxu0 0.0
    %1377 = vmatprep.subr.mxu0 0.0
    %1378 = vmatpush1.msra.mxu0 0.0
    %1379 = vmatprep.subr.mxu0 0.0
    %1380 = vmatpush1.msra.mxu0 0.0
    %1381 = vmatprep.subr.mxu0 0.0
    %1382 = vmatpush1.msra.mxu0 0.0
    %1383 = vmatprep.subr.mxu0 0.0
    %1384 = vmatpush1.msra.mxu0 0.0
    %1385 = vmatprep.subr.mxu0 0.0
    %1386 = vmatpush1.msra.mxu0 0.0
    %1387 = vmatprep.subr.mxu0 0.0
    %1388 = vmatpush1.msra.mxu0 0.0
    %1389 = vmatprep.mubr.f32.mxu0 0.0
    %1390 = vmatmul.mubr.f32.gmra.mrb[0].mxu0 %v1323
    %v1391 = vpop.f32.mrb[0].mxu0
    %v1392 = vadd.f32 0.0, %v1391
    %v1393 = vpop.f32.mrb[0].mxu0
    %1394 = vdwg.mxu0
    %1395 = vrot.lane.b32.xlu0 %v165, 64
    %v1396 = vpop.permute.xlu0 %1395
    %v1399 = vsel %vm168, %v862, 0
    %1401 = vmatprep.subr.mxu0 0.0
    %1402 = vmatpush1.msra.mxu0 %v1396
    %1403 = vmatprep.subr.mxu0 0.0
    %1404 = vmatpush1.msra.mxu0 0.0
    %1405 = vmatprep.subr.mxu0 0.0
    %1406 = vmatpush1.msra.mxu0 0.0
    %1407 = vmatprep.subr.mxu0 0.0
    %1408 = vmatpush1.msra.mxu0 0.0
    %1409 = vmatprep.subr.mxu0 0.0
    %1410 = vmatpush1.msra.mxu0 0.0
    %1411 = vmatprep.subr.mxu0 0.0
    %1412 = vmatpush1.msra.mxu0 0.0
    %1413 = vmatprep.subr.mxu0 0.0
    %1414 = vmatpush1.msra.mxu0 0.0
    %1415 = vmatprep.subr.mxu0 0.0
    %1416 = vmatpush1.msra.mxu0 0.0
    %1417 = vmatprep.subr.mxu0 0.0
    %1418 = vmatpush1.msra.mxu0 0.0
    %1419 = vmatprep.subr.mxu0 0.0
    %1420 = vmatpush1.msra.mxu0 0.0
    %1421 = vmatprep.subr.mxu0 0.0
    %1422 = vmatpush1.msra.mxu0 0.0
    %1423 = vmatprep.subr.mxu0 0.0
    %1424 = vmatpush1.msra.mxu0 0.0
    %1425 = vmatprep.subr.mxu0 0.0
    %1426 = vmatpush1.msra.mxu0 0.0
    %1427 = vmatprep.subr.mxu0 0.0
    %1428 = vmatpush1.msra.mxu0 0.0
    %1429 = vmatprep.subr.mxu0 0.0
    %1430 = vmatpush1.msra.mxu0 0.0
    %1431 = vmatprep.subr.mxu0 0.0
    %1432 = vmatpush1.msra.mxu0 0.0
    %1433 = vmatprep.subr.mxu0 0.0
    %1434 = vmatpush1.msra.mxu0 0.0
    %1435 = vmatprep.subr.mxu0 0.0
    %1436 = vmatpush1.msra.mxu0 0.0
    %1437 = vmatprep.subr.mxu0 0.0
    %1438 = vmatpush1.msra.mxu0 0.0
    %1439 = vmatprep.subr.mxu0 0.0
    %1440 = vmatpush1.msra.mxu0 0.0
    %1441 = vmatprep.subr.mxu0 0.0
    %1442 = vmatpush1.msra.mxu0 0.0
    %1443 = vmatprep.subr.mxu0 0.0
    %1444 = vmatpush1.msra.mxu0 0.0
    %1445 = vmatprep.subr.mxu0 0.0
    %1446 = vmatpush1.msra.mxu0 0.0
    %1447 = vmatprep.subr.mxu0 0.0
    %1448 = vmatpush1.msra.mxu0 0.0
    %1449 = vmatprep.subr.mxu0 0.0
    %1450 = vmatpush1.msra.mxu0 0.0
    %1451 = vmatprep.subr.mxu0 0.0
    %1452 = vmatpush1.msra.mxu0 0.0
    %1453 = vmatprep.subr.mxu0 0.0
    %1454 = vmatpush1.msra.mxu0 0.0
    %1455 = vmatprep.subr.mxu0 0.0
    %1456 = vmatpush1.msra.mxu0 0.0
    %1457 = vmatprep.subr.mxu0 0.0
    %1458 = vmatpush1.msra.mxu0 0.0
    %1459 = vmatprep.subr.mxu0 0.0
    %1460 = vmatpush1.msra.mxu0 0.0
    %1461 = vmatprep.subr.mxu0 0.0
    %1462 = vmatpush1.msra.mxu0 0.0
    %1463 = vmatprep.subr.mxu0 0.0
    %1464 = vmatpush1.msra.mxu0 0.0
    %1465 = vmatprep.mubr.f32.mxu0 0.0
    %1466 = vmatmul.mubr.f32.gmra.mrb[0].mxu0 %v1399
    %v1467 = vpop.f32.mrb[0].mxu0
    %v1468 = vadd.f32 0.0, %v1467
    %v1469 = vpop.f32.mrb[0].mxu0
    %1470 = vdwg.mxu0
    %v1471 = vld [vmem:[%s3] sm:$0xff]
    %v1472 = vld [vmem:[%s3 + $0x8] sm:$0xff]
    %v1473 = vld [vmem:[%s3 + $0x10] sm:$0xff]
    %v1474 = vld [vmem:[%s3 + $0x18] sm:$0xff]
    %v1476 = vsel %vm168, %v936, 0
    %v1479 = vsel %vm168, %v1012, 0
    %1481 = vmatprep.subr.mxu0 0.0
    %1482 = vmatpush1.msra.mxu0 %v1471
    %1483 = vmatprep.subr.mxu0 0.0
    %1484 = vmatpush1.msra.mxu0 0.0
    %1485 = vmatprep.subr.mxu0 0.0
    %1486 = vmatpush1.msra.mxu0 0.0
    %1487 = vmatprep.subr.mxu0 0.0
    %1488 = vmatpush1.msra.mxu0 0.0
    %1489 = vmatprep.subr.mxu0 0.0
    %1490 = vmatpush1.msra.mxu0 0.0
    %1491 = vmatprep.subr.mxu0 0.0
    %1492 = vmatpush1.msra.mxu0 0.0
    %1493 = vmatprep.subr.mxu0 0.0
    %1494 = vmatpush1.msra.mxu0 0.0
    %1495 = vmatprep.subr.mxu0 0.0
    %1496 = vmatpush1.msra.mxu0 0.0
    %1497 = vmatprep.subr.mxu0 0.0
    %1498 = vmatpush1.msra.mxu0 0.0
    %1499 = vmatprep.subr.mxu0 0.0
    %1500 = vmatpush1.msra.mxu0 0.0
    %1501 = vmatprep.subr.mxu0 0.0
    %1502 = vmatpush1.msra.mxu0 0.0
    %1503 = vmatprep.subr.mxu0 0.0
    %1504 = vmatpush1.msra.mxu0 0.0
    %1505 = vmatprep.subr.mxu0 0.0
    %1506 = vmatpush1.msra.mxu0 0.0
    %1507 = vmatprep.subr.mxu0 0.0
    %1508 = vmatpush1.msra.mxu0 0.0
    %1509 = vmatprep.subr.mxu0 0.0
    %1510 = vmatpush1.msra.mxu0 0.0
    %1511 = vmatprep.subr.mxu0 0.0
    %1512 = vmatpush1.msra.mxu0 0.0
    %1513 = vmatprep.subr.mxu0 0.0
    %1514 = vmatpush1.msra.mxu0 0.0
    %1515 = vmatprep.subr.mxu0 0.0
    %1516 = vmatpush1.msra.mxu0 0.0
    %1517 = vmatprep.subr.mxu0 0.0
    %1518 = vmatpush1.msra.mxu0 0.0
    %1519 = vmatprep.subr.mxu0 0.0
    %1520 = vmatpush1.msra.mxu0 0.0
    %1521 = vmatprep.subr.mxu0 0.0
    %1522 = vmatpush1.msra.mxu0 0.0
    %1523 = vmatprep.subr.mxu0 0.0
    %1524 = vmatpush1.msra.mxu0 0.0
    %1525 = vmatprep.subr.mxu0 0.0
    %1526 = vmatpush1.msra.mxu0 0.0
    %1527 = vmatprep.subr.mxu0 0.0
    %1528 = vmatpush1.msra.mxu0 0.0
    %1529 = vmatprep.subr.mxu0 0.0
    %1530 = vmatpush1.msra.mxu0 0.0
    %1531 = vmatprep.subr.mxu0 0.0
    %1532 = vmatpush1.msra.mxu0 0.0
    %1533 = vmatprep.subr.mxu0 0.0
    %1534 = vmatpush1.msra.mxu0 0.0
    %1535 = vmatprep.subr.mxu0 0.0
    %1536 = vmatpush1.msra.mxu0 0.0
    %1537 = vmatprep.subr.mxu0 0.0
    %1538 = vmatpush1.msra.mxu0 0.0
    %1539 = vmatprep.subr.mxu0 0.0
    %1540 = vmatpush1.msra.mxu0 0.0
    %1541 = vmatprep.subr.mxu0 0.0
    %1542 = vmatpush1.msra.mxu0 0.0
    %1543 = vmatprep.subr.mxu0 0.0
    %1544 = vmatpush1.msra.mxu0 0.0
    %1545 = vmatprep.mubr.f32.mxu0 0.0
    %1546 = vmatmul.mubr.f32.gmra.mrb[0].mxu0 %v1476
    %v1547 = vpop.f32.mrb[0].mxu0
    %v1548 = vadd.f32 0.0, %v1547
    %v1549 = vpop.f32.mrb[0].mxu0
    %1550 = vmatprep.mubr.f32.mxu0 0.0
    %1551 = vmatmul.mubr.f32.gmra.mrb[0].mxu0 %v1479
    %v1552 = vpop.f32.mrb[0].mxu0
    %v1553 = vadd.f32 0.0, %v1552
    %v1554 = vpop.f32.mrb[0].mxu0
    %1555 = vdwg.mxu0
    %v1557 = vsel %vm168, %v1088, 0
    %v1560 = vsel %vm168, %v1164, 0
    %1562 = vmatprep.subr.mxu0 0.0
    %1563 = vmatpush1.msra.mxu0 %v1472
    %1564 = vmatprep.subr.mxu0 0.0
    %1565 = vmatpush1.msra.mxu0 0.0
    %1566 = vmatprep.subr.mxu0 0.0
    %1567 = vmatpush1.msra.mxu0 0.0
    %1568 = vmatprep.subr.mxu0 0.0
    %1569 = vmatpush1.msra.mxu0 0.0
    %1570 = vmatprep.subr.mxu0 0.0
    %1571 = vmatpush1.msra.mxu0 0.0
    %1572 = vmatprep.subr.mxu0 0.0
    %1573 = vmatpush1.msra.mxu0 0.0
    %1574 = vmatprep.subr.mxu0 0.0
    %1575 = vmatpush1.msra.mxu0 0.0
    %1576 = vmatprep.subr.mxu0 0.0
    %1577 = vmatpush1.msra.mxu0 0.0
    %1578 = vmatprep.subr.mxu0 0.0
    %1579 = vmatpush1.msra.mxu0 0.0
    %1580 = vmatprep.subr.mxu0 0.0
    %1581 = vmatpush1.msra.mxu0 0.0
    %1582 = vmatprep.subr.mxu0 0.0
    %1583 = vmatpush1.msra.mxu0 0.0
    %1584 = vmatprep.subr.mxu0 0.0
    %1585 = vmatpush1.msra.mxu0 0.0
    %1586 = vmatprep.subr.mxu0 0.0
    %1587 = vmatpush1.msra.mxu0 0.0
    %1588 = vmatprep.subr.mxu0 0.0
    %1589 = vmatpush1.msra.mxu0 0.0
    %1590 = vmatprep.subr.mxu0 0.0
    %1591 = vmatpush1.msra.mxu0 0.0
    %1592 = vmatprep.subr.mxu0 0.0
    %1593 = vmatpush1.msra.mxu0 0.0
    %1594 = vmatprep.subr.mxu0 0.0
    %1595 = vmatpush1.msra.mxu0 0.0
    %1596 = vmatprep.subr.mxu0 0.0
    %1597 = vmatpush1.msra.mxu0 0.0
    %1598 = vmatprep.subr.mxu0 0.0
    %1599 = vmatpush1.msra.mxu0 0.0
    %1600 = vmatprep.subr.mxu0 0.0
    %1601 = vmatpush1.msra.mxu0 0.0
    %1602 = vmatprep.subr.mxu0 0.0
    %1603 = vmatpush1.msra.mxu0 0.0
    %1604 = vmatprep.subr.mxu0 0.0
    %1605 = vmatpush1.msra.mxu0 0.0
    %1606 = vmatprep.subr.mxu0 0.0
    %1607 = vmatpush1.msra.mxu0 0.0
    %1608 = vmatprep.subr.mxu0 0.0
    %1609 = vmatpush1.msra.mxu0 0.0
    %1610 = vmatprep.subr.mxu0 0.0
    %1611 = vmatpush1.msra.mxu0 0.0
    %1612 = vmatprep.subr.mxu0 0.0
    %1613 = vmatpush1.msra.mxu0 0.0
    %1614 = vmatprep.subr.mxu0 0.0
    %1615 = vmatpush1.msra.mxu0 0.0
    %1616 = vmatprep.subr.mxu0 0.0
    %1617 = vmatpush1.msra.mxu0 0.0
    %1618 = vmatprep.subr.mxu0 0.0
    %1619 = vmatpush1.msra.mxu0 0.0
    %1620 = vmatprep.subr.mxu0 0.0
    %1621 = vmatpush1.msra.mxu0 0.0
    %1622 = vmatprep.subr.mxu0 0.0
    %1623 = vmatpush1.msra.mxu0 0.0
    %1624 = vmatprep.subr.mxu0 0.0
    %1625 = vmatpush1.msra.mxu0 0.0
    %1626 = vmatprep.mubr.f32.mxu0 0.0
    %1627 = vmatmul.mubr.f32.gmra.mrb[0].mxu0 %v1557
    %v1628 = vpop.f32.mrb[0].mxu0
    %v1629 = vadd.f32 0.0, %v1628
    %v1630 = vpop.f32.mrb[0].mxu0
    %1631 = vmatprep.mubr.f32.mxu0 0.0
    %1632 = vmatmul.mubr.f32.gmra.mrb[0].mxu0 %v1560
    %v1633 = vpop.f32.mrb[0].mxu0
    %v1634 = vadd.f32 0.0, %v1633
    %v1635 = vpop.f32.mrb[0].mxu0
    %1636 = vdwg.mxu0
    %v1638 = vsel %vm168, %v1240, 0
    %v1641 = vsel %vm168, %v1316, 0
    %1643 = vmatprep.subr.mxu0 0.0
    %1644 = vmatpush1.msra.mxu0 %v1473
    %1645 = vmatprep.subr.mxu0 0.0
    %1646 = vmatpush1.msra.mxu0 0.0
    %1647 = vmatprep.subr.mxu0 0.0
    %1648 = vmatpush1.msra.mxu0 0.0
    %1649 = vmatprep.subr.mxu0 0.0
    %1650 = vmatpush1.msra.mxu0 0.0
    %1651 = vmatprep.subr.mxu0 0.0
    %1652 = vmatpush1.msra.mxu0 0.0
    %1653 = vmatprep.subr.mxu0 0.0
    %1654 = vmatpush1.msra.mxu0 0.0
    %1655 = vmatprep.subr.mxu0 0.0
    %1656 = vmatpush1.msra.mxu0 0.0
    %1657 = vmatprep.subr.mxu0 0.0
    %1658 = vmatpush1.msra.mxu0 0.0
    %1659 = vmatprep.subr.mxu0 0.0
    %1660 = vmatpush1.msra.mxu0 0.0
    %1661 = vmatprep.subr.mxu0 0.0
    %1662 = vmatpush1.msra.mxu0 0.0
    %1663 = vmatprep.subr.mxu0 0.0
    %1664 = vmatpush1.msra.mxu0 0.0
    %1665 = vmatprep.subr.mxu0 0.0
    %1666 = vmatpush1.msra.mxu0 0.0
    %1667 = vmatprep.subr.mxu0 0.0
    %1668 = vmatpush1.msra.mxu0 0.0
    %1669 = vmatprep.subr.mxu0 0.0
    %1670 = vmatpush1.msra.mxu0 0.0
    %1671 = vmatprep.subr.mxu0 0.0
    %1672 = vmatpush1.msra.mxu0 0.0
    %1673 = vmatprep.subr.mxu0 0.0
    %1674 = vmatpush1.msra.mxu0 0.0
    %1675 = vmatprep.subr.mxu0 0.0
    %1676 = vmatpush1.msra.mxu0 0.0
    %1677 = vmatprep.subr.mxu0 0.0
    %1678 = vmatpush1.msra.mxu0 0.0
    %1679 = vmatprep.subr.mxu0 0.0
    %1680 = vmatpush1.msra.mxu0 0.0
    %1681 = vmatprep.subr.mxu0 0.0
    %1682 = vmatpush1.msra.mxu0 0.0
    %1683 = vmatprep.subr.mxu0 0.0
    %1684 = vmatpush1.msra.mxu0 0.0
    %1685 = vmatprep.subr.mxu0 0.0
    %1686 = vmatpush1.msra.mxu0 0.0
    %1687 = vmatprep.subr.mxu0 0.0
    %1688 = vmatpush1.msra.mxu0 0.0
    %1689 = vmatprep.subr.mxu0 0.0
    %1690 = vmatpush1.msra.mxu0 0.0
    %1691 = vmatprep.subr.mxu0 0.0
    %1692 = vmatpush1.msra.mxu0 0.0
    %1693 = vmatprep.subr.mxu0 0.0
    %1694 = vmatpush1.msra.mxu0 0.0
    %1695 = vmatprep.subr.mxu0 0.0
    %1696 = vmatpush1.msra.mxu0 0.0
    %1697 = vmatprep.subr.mxu0 0.0
    %1698 = vmatpush1.msra.mxu0 0.0
    %1699 = vmatprep.subr.mxu0 0.0
    %1700 = vmatpush1.msra.mxu0 0.0
    %1701 = vmatprep.subr.mxu0 0.0
    %1702 = vmatpush1.msra.mxu0 0.0
    %1703 = vmatprep.subr.mxu0 0.0
    %1704 = vmatpush1.msra.mxu0 0.0
    %1705 = vmatprep.subr.mxu0 0.0
    %1706 = vmatpush1.msra.mxu0 0.0
    %1707 = vmatprep.mubr.f32.mxu0 0.0
    %1708 = vmatmul.mubr.f32.gmra.mrb[0].mxu0 %v1638
    %v1709 = vpop.f32.mrb[0].mxu0
    %v1710 = vadd.f32 0.0, %v1709
    %v1711 = vpop.f32.mrb[0].mxu0
    %1712 = vmatprep.mubr.f32.mxu0 0.0
    %1713 = vmatmul.mubr.f32.gmra.mrb[0].mxu0 %v1641
    %v1714 = vpop.f32.mrb[0].mxu0
    %v1715 = vadd.f32 0.0, %v1714
    %v1716 = vpop.f32.mrb[0].mxu0
    %1717 = vdwg.mxu0
    %v1719 = vsel %vm168, %v1392, 0
    %v1722 = vsel %vm168, %v1468, 0
    %1724 = vmatprep.subr.mxu0 0.0
    %1725 = vmatpush1.msra.mxu0 %v1474
    %1726 = vmatprep.subr.mxu0 0.0
    %1727 = vmatpush1.msra.mxu0 0.0
    %1728 = vmatprep.subr.mxu0 0.0
    %1729 = vmatpush1.msra.mxu0 0.0
    %1730 = vmatprep.subr.mxu0 0.0
    %1731 = vmatpush1.msra.mxu0 0.0
    %1732 = vmatprep.subr.mxu0 0.0
    %1733 = vmatpush1.msra.mxu0 0.0
    %1734 = vmatprep.subr.mxu0 0.0
    %1735 = vmatpush1.msra.mxu0 0.0
    %1736 = vmatprep.subr.mxu0 0.0
    %1737 = vmatpush1.msra.mxu0 0.0
    %1738 = vmatprep.subr.mxu0 0.0
    %1739 = vmatpush1.msra.mxu0 0.0
    %1740 = vmatprep.subr.mxu0 0.0
    %1741 = vmatpush1.msra.mxu0 0.0
    %1742 = vmatprep.subr.mxu0 0.0
    %1743 = vmatpush1.msra.mxu0 0.0
    %1744 = vmatprep.subr.mxu0 0.0
    %1745 = vmatpush1.msra.mxu0 0.0
    %1746 = vmatprep.subr.mxu0 0.0
    %1747 = vmatpush1.msra.mxu0 0.0
    %1748 = vmatprep.subr.mxu0 0.0
    %1749 = vmatpush1.msra.mxu0 0.0
    %1750 = vmatprep.subr.mxu0 0.0
    %1751 = vmatpush1.msra.mxu0 0.0
    %1752 = vmatprep.subr.mxu0 0.0
    %1753 = vmatpush1.msra.mxu0 0.0
    %1754 = vmatprep.subr.mxu0 0.0
    %1755 = vmatpush1.msra.mxu0 0.0
    %1756 = vmatprep.subr.mxu0 0.0
    %1757 = vmatpush1.msra.mxu0 0.0
    %1758 = vmatprep.subr.mxu0 0.0
    %1759 = vmatpush1.msra.mxu0 0.0
    %1760 = vmatprep.subr.mxu0 0.0
    %1761 = vmatpush1.msra.mxu0 0.0
    %1762 = vmatprep.subr.mxu0 0.0
    %1763 = vmatpush1.msra.mxu0 0.0
    %1764 = vmatprep.subr.mxu0 0.0
    %1765 = vmatpush1.msra.mxu0 0.0
    %1766 = vmatprep.subr.mxu0 0.0
    %1767 = vmatpush1.msra.mxu0 0.0
    %1768 = vmatprep.subr.mxu0 0.0
    %1769 = vmatpush1.msra.mxu0 0.0
    %1770 = vmatprep.subr.mxu0 0.0
    %1771 = vmatpush1.msra.mxu0 0.0
    %1772 = vmatprep.subr.mxu0 0.0
    %1773 = vmatpush1.msra.mxu0 0.0
    %1774 = vmatprep.subr.mxu0 0.0
    %1775 = vmatpush1.msra.mxu0 0.0
    %1776 = vmatprep.subr.mxu0 0.0
    %1777 = vmatpush1.msra.mxu0 0.0
    %1778 = vmatprep.subr.mxu0 0.0
    %1779 = vmatpush1.msra.mxu0 0.0
    %1780 = vmatprep.subr.mxu0 0.0
    %1781 = vmatpush1.msra.mxu0 0.0
    %1782 = vmatprep.subr.mxu0 0.0
    %1783 = vmatpush1.msra.mxu0 0.0
    %1784 = vmatprep.subr.mxu0 0.0
    %1785 = vmatpush1.msra.mxu0 0.0
    %1786 = vmatprep.subr.mxu0 0.0
    %1787 = vmatpush1.msra.mxu0 0.0
    %1788 = vmatprep.mubr.f32.mxu0 0.0
    %1789 = vmatmul.mubr.f32.gmra.mrb[0].mxu0 %v1719
    %v1790 = vpop.f32.mrb[0].mxu0
    %v1791 = vadd.f32 0.0, %v1790
    %v1792 = vpop.f32.mrb[0].mxu0
    %1793 = vmatprep.mubr.f32.mxu0 0.0
    %1794 = vmatmul.mubr.f32.gmra.mrb[0].mxu0 %v1722
    %v1795 = vpop.f32.mrb[0].mxu0
    %v1796 = vadd.f32 0.0, %v1795
    %v1797 = vpop.f32.mrb[0].mxu0
    %1798 = vdwg.mxu0
    %v1799 = vadd.f32 %v1548, %v1629
    %v1800 = vadd.f32 %v1553, %v1634
    %v1801 = vadd.f32 %v1799, %v1710
    %v1802 = vadd.f32 %v1800, %v1715
    %v1803 = vadd.f32 %v1801, %v1791
    %v1804 = vadd.f32 %v1802, %v1796
    %v1805 = vadd.f32 %v24, %v1803
    %v1806 = vadd.f32 %v25, %v1804
    %v1807 = vlaneseq
    %v1808 = vshrl.u32 %v1807, 7
    %v1809 = vsub.s32 2, %v1808
    %v1810 = vrot.slane %v26, %v1809
    %v1811 = vadd.f32 %v1805, %v1810
    %v1812 = vadd.f32 %v1806, %v1810
    %v1813 = vsel %vm27, %v1811, 0.0
    %1814 = vadd.xlane.f32.xlu0 %v1813
    %v1815 = vpop.xlane.xlu0 %1814
    %v1816 = vsel %vm27, %v1812, 0.0
    %1817 = vadd.xlane.f32.xlu0 %v1816
    %v1818 = vpop.xlane.xlu0 %1817
    %v1819 = vmul.f32 %v1815, %v34
    %v1820 = vmul.f32 %v1818, %v34
    %v1821 = vsub.f32 %v1811, %v1819
    %v1822 = vsub.f32 %v1812, %v1820
    %v1823 = vmul.f32 %v1821, %v1821
    %v1824 = vmul.f32 %v1822, %v1822
    %v1825 = vsel %vm27, %v1823, 0.0
    %1826 = vadd.xlane.f32.xlu0 %v1825
    %v1827 = vpop.xlane.xlu0 %1826
    %v1828 = vsel %vm27, %v1824, 0.0
    %1829 = vadd.xlane.f32.xlu0 %v1828
    %v1830 = vpop.xlane.xlu0 %1829
    %v1831 = vmul.f32 %v1827, %v34
    %v1832 = vmul.f32 %v1830, %v34
    %v1833 = vadd.f32 %v1831, 1e-06
    %v1834 = vadd.f32 %v1832, 1e-06
    %v1835 = vrsqrt.pop %v1833
    %v1836 = vrsqrt.pop %v1834
    %v1837 = vmul.f32 %v1821, %v1835
    %v1838 = vmul.f32 %v1822, %v1836
    %v1839 = vlaneseq
    %v1840 = vshrl.u32 %v1839, 7
    %v1841 = vsub.s32 3, %v1840
    %v1842 = vrot.slane %v26, %v1841
    %v1843 = vmul.f32 %v1837, %v1842
    %v1844 = vmul.f32 %v1838, %v1842
    %v1845 = vlaneseq
    %v1846 = vshrl.u32 %v1845, 7
    %v1847 = vsub.s32 4, %v1846
    %v1848 = vrot.slane %v26, %v1847
    %v1849 = vadd.f32 %v1843, %v1848
    %v1850 = vadd.f32 %v1844, %v1848
    %v1851 = vld [vmem:[%s4] sm:$0xff]
    %v1852 = vld [vmem:[%s4 + $0x8] sm:$0xff]
    %v1853 = vld [vmem:[%s4 + $0x10] sm:$0xff]
    %v1854 = vld [vmem:[%s4 + $0x18] sm:$0xff]
    %v1855 = vlaneseq
    %v1856 = vshrl.u32 %v1855, 7
    %v1857 = vsub.s32 6, %v1856
    %v1858 = vrot.slane %v26, %v1857
    %v1860 = vsel %vm27, %v1849, 0
    %v1863 = vsel %vm27, %v1850, 0
    %1865 = vmatprep.subr.mxu0 0.0
    %1866 = vmatpush1.msra.mxu0 %v1851
    %1867 = vmatprep.subr.mxu0 0.0
    %1868 = vmatpush1.msra.mxu0 %v1852
    %1869 = vmatprep.subr.mxu0 0.0
    %1870 = vmatpush1.msra.mxu0 %v1853
    %1871 = vmatprep.subr.mxu0 0.0
    %1872 = vmatpush1.msra.mxu0 %v1854
    %1873 = vmatprep.subr.mxu0 0.0
    %1874 = vmatpush1.msra.mxu0 0.0
    %1875 = vmatprep.subr.mxu0 0.0
    %1876 = vmatpush1.msra.mxu0 0.0
    %1877 = vmatprep.subr.mxu0 0.0
    %1878 = vmatpush1.msra.mxu0 0.0
    %1879 = vmatprep.subr.mxu0 0.0
    %1880 = vmatpush1.msra.mxu0 0.0
    %1881 = vmatprep.subr.mxu0 0.0
    %1882 = vmatpush1.msra.mxu0 0.0
    %1883 = vmatprep.subr.mxu0 0.0
    %1884 = vmatpush1.msra.mxu0 0.0
    %1885 = vmatprep.subr.mxu0 0.0
    %1886 = vmatpush1.msra.mxu0 0.0
    %1887 = vmatprep.subr.mxu0 0.0
    %1888 = vmatpush1.msra.mxu0 0.0
    %1889 = vmatprep.subr.mxu0 0.0
    %1890 = vmatpush1.msra.mxu0 0.0
    %1891 = vmatprep.subr.mxu0 0.0
    %1892 = vmatpush1.msra.mxu0 0.0
    %1893 = vmatprep.subr.mxu0 0.0
    %1894 = vmatpush1.msra.mxu0 0.0
    %1895 = vmatprep.subr.mxu0 0.0
    %1896 = vmatpush1.msra.mxu0 0.0
    %1897 = vmatprep.subr.mxu0 0.0
    %1898 = vmatpush1.msra.mxu0 0.0
    %1899 = vmatprep.subr.mxu0 0.0
    %1900 = vmatpush1.msra.mxu0 0.0
    %1901 = vmatprep.subr.mxu0 0.0
    %1902 = vmatpush1.msra.mxu0 0.0
    %1903 = vmatprep.subr.mxu0 0.0
    %1904 = vmatpush1.msra.mxu0 0.0
    %1905 = vmatprep.subr.mxu0 0.0
    %1906 = vmatpush1.msra.mxu0 0.0
    %1907 = vmatprep.subr.mxu0 0.0
    %1908 = vmatpush1.msra.mxu0 0.0
    %1909 = vmatprep.subr.mxu0 0.0
    %1910 = vmatpush1.msra.mxu0 0.0
    %1911 = vmatprep.subr.mxu0 0.0
    %1912 = vmatpush1.msra.mxu0 0.0
    %1913 = vmatprep.subr.mxu0 0.0
    %1914 = vmatpush1.msra.mxu0 0.0
    %1915 = vmatprep.subr.mxu0 0.0
    %1916 = vmatpush1.msra.mxu0 0.0
    %1917 = vmatprep.subr.mxu0 0.0
    %1918 = vmatpush1.msra.mxu0 0.0
    %1919 = vmatprep.subr.mxu0 0.0
    %1920 = vmatpush1.msra.mxu0 0.0
    %1921 = vmatprep.subr.mxu0 0.0
    %1922 = vmatpush1.msra.mxu0 0.0
    %1923 = vmatprep.subr.mxu0 0.0
    %1924 = vmatpush1.msra.mxu0 0.0
    %1925 = vmatprep.subr.mxu0 0.0
    %1926 = vmatpush1.msra.mxu0 0.0
    %1927 = vmatprep.subr.mxu0 0.0
    %1928 = vmatpush1.msra.mxu0 0.0
    %1929 = vmatprep.mubr.f32.mxu0 0.0
    %1930 = vmatmul.mubr.f32.gmra.mrb[0].mxu0 %v1860
    %v1931 = vpop.f32.mrb[0].mxu0
    %v1932 = vadd.f32 %v1858, %v1931
    %v1933 = vpop.f32.mrb[0].mxu0
    %1934 = vmatprep.mubr.f32.mxu0 0.0
    %1935 = vmatmul.mubr.f32.gmra.mrb[0].mxu0 %v1863
    %v1936 = vpop.f32.mrb[0].mxu0
    %v1937 = vadd.f32 %v1858, %v1936
    %v1938 = vpop.f32.mrb[0].mxu0
    %1939 = vdwg.mxu0
    %v1940 = vmax.f32 %v1932, 0.0
    %v1941 = vmax.f32 %v1937, 0.0
    %v1942 = vld [vmem:[%s5] sm:$0xff]
    %v1943 = vld [vmem:[%s5 + $0x8] sm:$0xff]
    %v1944 = vld [vmem:[%s5 + $0x10] sm:$0xff]
    %v1945 = vld [vmem:[%s5 + $0x18] sm:$0xff]
    %v1946 = vld [vmem:[%s5 + $0x20] sm:$0xff]
    %v1947 = vld [vmem:[%s5 + $0x28] sm:$0xff]
    %v1948 = vld [vmem:[%s5 + $0x30] sm:$0xff]
    %v1949 = vld [vmem:[%s5 + $0x38] sm:$0xff]
    %v1950 = vld [vmem:[%s5 + $0x40] sm:$0xff]
    %v1951 = vld [vmem:[%s5 + $0x48] sm:$0xff]
    %v1952 = vld [vmem:[%s5 + $0x50] sm:$0xff]
    %v1953 = vld [vmem:[%s5 + $0x58] sm:$0xff]
    %v1954 = vld [vmem:[%s5 + $0x60] sm:$0xff]
    %v1955 = vld [vmem:[%s5 + $0x68] sm:$0xff]
    %v1956 = vld [vmem:[%s5 + $0x70] sm:$0xff]
    %v1957 = vld [vmem:[%s5 + $0x78] sm:$0xff]
    %v1958 = vlaneseq
    %v1959 = vshrl.u32 %v1958, 7
    %v1960 = vsub.s32 5, %v1959
    %v1961 = vrot.slane %v26, %v1960
    %1962 = vmatprep.subr.mxu0 0.0
    %1963 = vmatpush1.msra.mxu0 %v1942
    %1964 = vmatprep.subr.mxu0 0.0
    %1965 = vmatpush1.msra.mxu0 %v1943
    %1966 = vmatprep.subr.mxu0 0.0
    %1967 = vmatpush1.msra.mxu0 %v1944
    %1968 = vmatprep.subr.mxu0 0.0
    %1969 = vmatpush1.msra.mxu0 %v1945
    %1970 = vmatprep.subr.mxu0 0.0
    %1971 = vmatpush1.msra.mxu0 %v1946
    %1972 = vmatprep.subr.mxu0 0.0
    %1973 = vmatpush1.msra.mxu0 %v1947
    %1974 = vmatprep.subr.mxu0 0.0
    %1975 = vmatpush1.msra.mxu0 %v1948
    %1976 = vmatprep.subr.mxu0 0.0
    %1977 = vmatpush1.msra.mxu0 %v1949
    %1978 = vmatprep.subr.mxu0 0.0
    %1979 = vmatpush1.msra.mxu0 %v1950
    %1980 = vmatprep.subr.mxu0 0.0
    %1981 = vmatpush1.msra.mxu0 %v1951
    %1982 = vmatprep.subr.mxu0 0.0
    %1983 = vmatpush1.msra.mxu0 %v1952
    %1984 = vmatprep.subr.mxu0 0.0
    %1985 = vmatpush1.msra.mxu0 %v1953
    %1986 = vmatprep.subr.mxu0 0.0
    %1987 = vmatpush1.msra.mxu0 %v1954
    %1988 = vmatprep.subr.mxu0 0.0
    %1989 = vmatpush1.msra.mxu0 %v1955
    %1990 = vmatprep.subr.mxu0 0.0
    %1991 = vmatpush1.msra.mxu0 %v1956
    %1992 = vmatprep.subr.mxu0 0.0
    %1993 = vmatpush1.msra.mxu0 %v1957
    %1994 = vmatprep.subr.mxu0 0.0
    %1995 = vmatpush1.msra.mxu0 0.0
    %1996 = vmatprep.subr.mxu0 0.0
    %1997 = vmatpush1.msra.mxu0 0.0
    %1998 = vmatprep.subr.mxu0 0.0
    %1999 = vmatpush1.msra.mxu0 0.0
    %2000 = vmatprep.subr.mxu0 0.0
    %2001 = vmatpush1.msra.mxu0 0.0
    %2002 = vmatprep.subr.mxu0 0.0
    %2003 = vmatpush1.msra.mxu0 0.0
    %2004 = vmatprep.subr.mxu0 0.0
    %2005 = vmatpush1.msra.mxu0 0.0
    %2006 = vmatprep.subr.mxu0 0.0
    %2007 = vmatpush1.msra.mxu0 0.0
    %2008 = vmatprep.subr.mxu0 0.0
    %2009 = vmatpush1.msra.mxu0 0.0
    %2010 = vmatprep.subr.mxu0 0.0
    %2011 = vmatpush1.msra.mxu0 0.0
    %2012 = vmatprep.subr.mxu0 0.0
    %2013 = vmatpush1.msra.mxu0 0.0
    %2014 = vmatprep.subr.mxu0 0.0
    %2015 = vmatpush1.msra.mxu0 0.0
    %2016 = vmatprep.subr.mxu0 0.0
    %2017 = vmatpush1.msra.mxu0 0.0
    %2018 = vmatprep.subr.mxu0 0.0
    %2019 = vmatpush1.msra.mxu0 0.0
    %2020 = vmatprep.subr.mxu0 0.0
    %2021 = vmatpush1.msra.mxu0 0.0
    %2022 = vmatprep.subr.mxu0 0.0
    %2023 = vmatpush1.msra.mxu0 0.0
    %2024 = vmatprep.subr.mxu0 0.0
    %2025 = vmatpush1.msra.mxu0 0.0
    %2026 = vmatprep.mubr.f32.mxu0 0.0
    %2027 = vmatmul.mubr.f32.gmra.mrb[0].mxu0 %v1940
    %v2028 = vpop.f32.mrb[0].mxu0
    %v2029 = vadd.f32 %v1961, %v2028
    %v2030 = vpop.f32.mrb[0].mxu0
    %2031 = vmatprep.mubr.f32.mxu0 0.0
    %2032 = vmatmul.mubr.f32.gmra.mrb[0].mxu0 %v1941
    %v2033 = vpop.f32.mrb[0].mxu0
    %v2034 = vadd.f32 %v1961, %v2033
    %v2035 = vpop.f32.mrb[0].mxu0
    %2036 = vdwg.mxu0
    %v2037 = vadd.f32 %v1811, %v2029
    %v2038 = vadd.f32 %v1812, %v2034
    %2039 = vst.msk [vmem:[#allocation2] sm:$0xff] %vm27, %v2037
    %2040 = vst.msk [vmem:[#allocation2 + $0x8] sm:$0xff] %vm27, %v2038
    // Predicated region
    $region26: #{tpu_custom_call.1} parent=1 // pred_check
      _
    $region27: #{tpu_custom_call.1} parent=1 // pred_check_branch
      %2042 = sbr.rel (0) target = $region29
    $region28: #{tpu_custom_call.1} parent=1 // pred_region
      %s2044 = ssub.s32 256, 256
      %2045 = vsyncadd [#allocation3], %s2044
      %s2046 = sshll.u32 [#allocation2], 4
      %s2047 = int_to_ptr.vmem [resolvable:$true] %s2046
      %2052 = dma.vmem_to_hbm [thread:$0]  %s2047, 256, %s6, [#allocation3], 128, 128, 8
    $region29: #{tpu_custom_call.1} parent=1 // pred_fallthru
      _
    // Predicated region
    $region30: #{tpu_custom_call.1} parent=1 // pred_check
      _
    $region31: #{tpu_custom_call.1} parent=1 // pred_check_branch
      %2054 = sbr.rel (0) target = $region33
    $region32: #{tpu_custom_call.1} parent=1 // pred_region
      %2055 = dma.done [#allocation3], 256
    $region33: #{tpu_custom_call.1} parent=1 // pred_fallthru
      _
    %2056 = vsyncpa [#allocation3], 1

</llo_original>
